<compile_context>
chip_gen: v5e
topology: v5e:2x2
jax: 0.10.0
libtpu: 0.0.40
codegen_flags: <defaults>
</compile_context>

<pallas_src>
import functools

import jax
import jax.numpy as jnp
from jax.experimental import pallas as pl
from jax.experimental.pallas import tpu as pltpu


# --------------------------------------------------------------------------- #
# Kernel
# --------------------------------------------------------------------------- #
def _mm_attn_kernel(img_ref, tab_ref, w_img_ref, b_img_ref, w_tab_ref, b_tab_ref,
                    concat_ref, tab_score_ref, img_score_ref):
    img = img_ref[...]                              # (TN, Di) in feature dtype
    tab = tab_ref[...]                              # (TN, Dt) in feature dtype
    img_f32 = img.astype(jnp.float32)
    tab_f32 = tab.astype(jnp.float32)

    # ---- image branch: Linear(Di -> 1) + sigmoid ---------------------------
    # Output dim is 1, so skip the MXU (it would use a single output lane):
    # VPU multiply + XLU lane-reduce, in slots the table GEMM does not use.
    logit = jnp.sum(img_f32 * w_img_ref[...], axis=-1, keepdims=True) + b_img_ref[0]
    img_score = jax.nn.sigmoid(logit)               # (TN, 1) f32

    # ---- table branch: Linear(Dt -> Dt) on the MXU, softmax over features --
    h = jnp.dot(tab_f32, w_tab_ref[...], preferred_element_type=jnp.float32)
    h = h + b_tab_ref[...]                          # (TN, Dt) + (1, Dt)
    m = jnp.max(h, axis=-1, keepdims=True)
    e = jnp.exp(h - m)
    denom = jnp.sum(e, axis=-1, keepdims=True)      # (TN, 1)
    # EUP reciprocal (otherwise idle slot) + VPU multiply instead of a full
    # (TN, Dt) divide.
    tab_score = e * pl.reciprocal(denom, approx=True)

    # ---- attend + fused concat (one lane-dense output slab) ----------------
    Di = img.shape[1]
    concat_ref[:, :Di] = (img_score * img_f32).astype(concat_ref.dtype)
    concat_ref[:, Di:] = (tab_score * tab_f32).astype(concat_ref.dtype)
    tab_score_ref[...] = tab_score.astype(tab_score_ref.dtype)
    img_score_ref[...] = img_score.astype(img_score_ref.dtype)


# --------------------------------------------------------------------------- #
# Tile / VMEM sizing
# --------------------------------------------------------------------------- #
def _round_up(x, m):
    return (x + m - 1) // m * m


def _physical_vmem_bytes():
    try:
        return int(pltpu.get_tpu_info().vmem_capacity_bytes)
    except Exception:
        return 64 << 20  # v7x per-TensorCore VMEM: safe lower bound for all gens.


_PHYS_VMEM_BYTES = _physical_vmem_bytes()


def _pick_tile(N, Di, Dt, in_itemsize, out_itemsize, tile_n, params_single_buffered):
    """Largest batch tile whose pipelined working set fits the VMEM budget."""
    di_pad = _round_up(Di, 128)                     # lane padding in VMEM
    dt_pad = _round_up(Dt, 128)

    # ~70% of physical VMEM: ~45 MiB on v7x (64 MiB/TC), ~90 MiB on v5e/v6e.
    vmem_limit = int(_PHYS_VMEM_BYTES * 0.7)

    # Resident f32 parameters: w_tab (Dt, Dt), w_img (1, Di), b_tab (1, Dt).
    param_bytes = 4 * (_round_up(Dt, 8) * dt_pad + 8 * di_pad + 8 * dt_pad)
    resident = param_bytes * (1 if params_single_buffered else 2)

    # Per-row pipeline footprint (double-buffered inputs + outputs);
    # img_score output pads to a full 128-lane row.
    per_row = (2 * in_itemsize * (di_pad + dt_pad)
               + 2 * out_itemsize * ((di_pad + dt_pad) + dt_pad + 128))
    budget = vmem_limit - resident - (1 << 20)      # margin for compiler scratch
    tn_cap = max(8, budget // per_row)

    TN = min(tile_n, N, tn_cap)
    if TN < N:
        TN = max(8, (TN // 8) * 8)                  # (8, 128) sublane rule
    # Megacore: keep >= 2 grid steps so both v7x TensorCores get work.
    if TN >= N and N >= 16:
        TN = _round_up((N + 1) // 2, 8)
    return int(TN), int(vmem_limit)


# --------------------------------------------------------------------------- #
# Wrapper
# --------------------------------------------------------------------------- #
@functools.partial(jax.jit, static_argnames=("tile_n", "single_buffer_params"))
def _multimodal_attention_impl(image_feature, table_feature, w_img, b_img,
                               w_tab, b_tab, *, tile_n, single_buffer_params):
    N, Di = image_feature.shape
    _, Dt = table_feature.shape

    out_dtype = jnp.result_type(image_feature.dtype, table_feature.dtype)
    in_itemsize = jnp.dtype(image_feature.dtype).itemsize
    out_itemsize = jnp.dtype(out_dtype).itemsize

    TN, vmem_limit = _pick_tile(N, Di, Dt, in_itemsize, out_itemsize,
                                tile_n, single_buffer_params)
    grid = (pl.cdiv(N, TN),)

    # Constant-index_map parameters: single-buffer them (pure VMEM saving);
    # fall back gracefully if pl.Buffered(1) is unavailable in this build.
    param_mode = {}
    if single_buffer_params and hasattr(pl, "Buffered"):
        param_mode = dict(pipeline_mode=pl.Buffered(1))

    flops = (2 * N * Dt * Dt            # table GEMM
             + 2 * N * Di               # image dot
             + 6 * N * Dt               # softmax
             + 2 * N * (Di + Dt))       # attend multiplies
    transcendentals = N * Dt + 2 * N    # exp + sigmoid + reciprocal
    bytes_accessed = (in_itemsize * N * (Di + Dt)
                      + 4 * (Di + 1 + Dt * Dt + Dt)
                      + out_itemsize * (N * (Di + Dt) + N * Dt + N))

    concat, tab_score, img_score = pl.pallas_call(
        _mm_attn_kernel,
        out_shape=(
            jax.ShapeDtypeStruct((N, Di + Dt), out_dtype),
            jax.ShapeDtypeStruct((N, Dt), out_dtype),
            jax.ShapeDtypeStruct((N, 1), out_dtype),
        ),
        grid_spec=pltpu.PrefetchScalarGridSpec(
            num_scalar_prefetch=0,
            grid=grid,
            in_specs=[
                pl.BlockSpec((TN, Di), lambda i: (i, 0)),            # image tile
                pl.BlockSpec((TN, Dt), lambda i: (i, 0)),            # table tile
                pl.BlockSpec((1, Di), lambda i: (0, 0), **param_mode),   # w_img
                pl.BlockSpec(memory_space=pltpu.MemorySpace.SMEM),       # b_img
                pl.BlockSpec((Dt, Dt), lambda i: (0, 0), **param_mode),  # w_tab
                pl.BlockSpec((1, Dt), lambda i: (0, 0), **param_mode),   # b_tab
            ],
            out_specs=(
                pl.BlockSpec((TN, Di + Dt), lambda i: (i, 0)),
                pl.BlockSpec((TN, Dt), lambda i: (i, 0)),
                pl.BlockSpec((TN, 1), lambda i: (i, 0)),
            ),
        ),
        compiler_params=pltpu.CompilerParams(
            # Row tiles are independent (no accumulator) -> megacore-shard.
            dimension_semantics=("parallel",),
            vmem_limit_bytes=vmem_limit,
        ),
        cost_estimate=pl.CostEstimate(
            flops=flops,
            transcendentals=transcendentals,
            bytes_accessed=bytes_accessed,
        ),
    )(image_feature, table_feature, w_img, b_img, w_tab,
      b_tab.reshape(1, Dt))
    return concat, tab_score, img_score


def multimodal_attention_forward(image_feature, table_feature,
                                 w_img, b_img, w_tab, b_tab, *, tile_n=2048):
    """Returns (concat_feature, table_attention_score, image_attention_score).

    image_feature: (N, Di) f32 or bf16
    table_feature: (N, Dt) f32 or bf16
    w_img: (1, Di), b_img: (1,)     -- image_attention = nn.Linear(Di, 1)
    w_tab: (Dt, Dt), b_tab: (Dt,)   -- table_attention = nn.Linear(Dt, Dt),
                                       stored pre-transposed as (in, out)
    Keep Di a multiple of 128 for lane-aligned concat stores (ragged Di is
    correct but slower).
    """
    try:
        return _multimodal_attention_impl(
            image_feature, table_feature, w_img, b_img, w_tab, b_tab,
            tile_n=tile_n, single_buffer_params=True)
    except Exception:
        # pl.Buffered(1) rejected by this JAX build -> double-buffer the params.
        return _multimodal_attention_impl(
            image_feature, table_feature, w_img, b_img, w_tab, b_tab,
            tile_n=tile_n, single_buffer_params=False)


def init_multimodal_attention_params(key, image_feature_dim, table_feature_dim):
    """PyTorch-Linear-style uniform init (synthetic weights)."""
    k1, k2, k3, k4 = jax.random.split(key, 4)
    bi = 1.0 / jnp.sqrt(image_feature_dim)
    bt = 1.0 / jnp.sqrt(table_feature_dim)
    # image_attention: torch weight (1, Di) kept as-is; bias (1,)
    w_img = jax.random.uniform(k1, (1, image_feature_dim), jnp.float32, -bi, bi)
    b_img = jax.random.uniform(k2, (1,), jnp.float32, -bi, bi)
    # table_attention: torch weight (out, in) stored pre-transposed -> (in, out)
    w_tab = jax.random.uniform(k3, (table_feature_dim, table_feature_dim),
                               jnp.float32, -bt, bt)
    b_tab = jax.random.uniform(k4, (table_feature_dim,), jnp.float32, -bt, bt)
    return w_img, b_img, w_tab, b_tab


if __name__ == "__main__":
    # Small shapes consistent with the module; N=32 exercises the auto
    # "grid >= 2" megacore split (TN=16, grid=(2,)).
    N, Di, Dt = 32, 256, 128

    key = jax.random.PRNGKey(0)
    k_img, k_tab, k_par = jax.random.split(key, 3)
    image_feature = jax.random.normal(k_img, (N, Di), jnp.float32)
    table_feature = jax.random.normal(k_tab, (N, Dt), jnp.float32)
    w_img, b_img, w_tab, b_tab = init_multimodal_attention_params(k_par, Di, Dt)

    concat, tab_score, img_score = multimodal_attention_forward(
        image_feature, table_feature, w_img, b_img, w_tab, b_tab)
    concat = jax.block_until_ready(concat)
    tab_score = jax.block_until_ready(tab_score)
    img_score = jax.block_until_ready(img_score)

    # Pure-JAX reference of the same math.
    img_score_ref = jax.nn.sigmoid(image_feature @ w_img[0] + b_img[0])[:, None]
    tab_score_ref = jax.nn.softmax(table_feature @ w_tab + b_tab, axis=1)
    concat_ref = jnp.concatenate(
        [img_score_ref * image_feature, tab_score_ref * table_feature], axis=1)

    assert concat.shape == (N, Di + Dt)
    assert tab_score.shape == (N, Dt)
    assert img_score.shape == (N, 1)
    assert jnp.allclose(img_score, img_score_ref, atol=2e-5, rtol=1e-5)
    # Tolerance loosened slightly for the EUP approx-reciprocal in the softmax.
    assert jnp.allclose(tab_score, tab_score_ref, atol=3e-3, rtol=3e-3)
    assert jnp.allclose(concat, concat_ref, atol=3e-3, rtol=3e-3)

    # bf16 I/O path (memory-bound deployment: halves HBM bytes).
    concat_bf, tab_bf, img_bf = multimodal_attention_forward(
        image_feature.astype(jnp.bfloat16), table_feature.astype(jnp.bfloat16),
        w_img, b_img, w_tab, b_tab)
    concat_bf = jax.block_until_ready(concat_bf)
    tab_bf = jax.block_until_ready(tab_bf)
    img_bf = jax.block_until_ready(img_bf)
    assert concat_bf.dtype == jnp.bfloat16 and concat_bf.shape == (N, Di + Dt)
    assert tab_bf.shape == (N, Dt) and img_bf.shape == (N, 1)
    assert bool(jnp.all(jnp.isfinite(concat_bf.astype(jnp.float32))))
    assert jnp.allclose(tab_bf.astype(jnp.float32), tab_score_ref,
                        atol=5e-2, rtol=5e-2)

    print("KERNEL_OK")
</pallas_src>

<mosaic_0001>
module attributes {stable_mosaic.version = 11 : i64} {
  func.func @_mm_attn_kernel(%arg0: i32, %arg1: memref<16x256xf32, #tpu.memory_space<vmem>>, %arg2: memref<16x128xf32, #tpu.memory_space<vmem>>, %arg3: memref<1x256xf32, #tpu.memory_space<vmem>>, %arg4: memref<1xf32, #tpu.memory_space<smem>>, %arg5: memref<128x128xf32, #tpu.memory_space<vmem>>, %arg6: memref<1x128xf32, #tpu.memory_space<vmem>>, %arg7: memref<16x384xf32, #tpu.memory_space<vmem>>, %arg8: memref<16x128xf32, #tpu.memory_space<vmem>>, %arg9: memref<16x1xf32, #tpu.memory_space<vmem>>) attributes {dimension_semantics = [#tpu.dimension_semantics<parallel>], iteration_bounds = array<i64: 2>, scalar_prefetch = 0 : i64, scratch_operands = 0 : i64, tpu.core_type = #tpu.core_type<tc>, window_params = [{transform_indices = @transform_0, window_bounds = array<i64: 16, 256>}, {transform_indices = @transform_1, window_bounds = array<i64: 16, 128>}, {pipeline_mode = #tpu.pipeline_mode<synchronous>, transform_indices = @transform_2, window_bounds = array<i64: 1, 256>}, {transform_indices = @transform_3, window_bounds = array<i64: 1>}, {pipeline_mode = #tpu.pipeline_mode<synchronous>, transform_indices = @transform_4, window_bounds = array<i64: 128, 128>}, {pipeline_mode = #tpu.pipeline_mode<synchronous>, transform_indices = @transform_5, window_bounds = array<i64: 1, 128>}, {transform_indices = @transform_6, window_bounds = array<i64: 16, 384>}, {transform_indices = @transform_7, window_bounds = array<i64: 16, 128>}, {transform_indices = @transform_8, window_bounds = array<i64: 16, 1>}]} {
    %c0 = arith.constant 0 : index
    %c0_0 = arith.constant 0 : index
    %0 = vector.load %arg1[%c0, %c0_0] : memref<16x256xf32, #tpu.memory_space<vmem>>, vector<16x256xf32>
    %c0_1 = arith.constant 0 : index
    %c0_2 = arith.constant 0 : index
    %1 = vector.load %arg2[%c0_1, %c0_2] : memref<16x128xf32, #tpu.memory_space<vmem>>, vector<16x128xf32>
    %c0_3 = arith.constant 0 : index
    %c0_4 = arith.constant 0 : index
    %2 = vector.load %arg3[%c0_3, %c0_4] : memref<1x256xf32, #tpu.memory_space<vmem>>, vector<1x256xf32>
    %3 = vector.broadcast %2 : vector<1x256xf32> to vector<16x256xf32>
    %4 = arith.mulf %0, %3 : vector<16x256xf32>
    %cst = arith.constant dense<0.000000e+00> : vector<16xf32>
    %5 = vector.multi_reduction <add>, %4, %cst [1] : vector<16x256xf32> to vector<16xf32>
    %6 = vector.shape_cast %5 : vector<16xf32> to vector<16x1xf32>
    %c0_5 = arith.constant 0 : index
    %7 = memref.load %arg4[%c0_5] : memref<1xf32, #tpu.memory_space<smem>>
    %8 = vector.broadcast %7 : f32 to vector<16x1xf32>
    %9 = arith.addf %6, %8 : vector<16x1xf32>
    %10 = arith.negf %9 : vector<16x1xf32>
    %11 = math.exp %10 : vector<16x1xf32>
    %cst_6 = arith.constant 1.000000e+00 : f32
    %12 = vector.broadcast %cst_6 : f32 to vector<16x1xf32>
    %13 = arith.addf %12, %11 : vector<16x1xf32>
    %14 = arith.divf %12, %13 : vector<16x1xf32>
    %c0_7 = arith.constant 0 : index
    %c0_8 = arith.constant 0 : index
    %15 = vector.load %arg5[%c0_7, %c0_8] : memref<128x128xf32, #tpu.memory_space<vmem>>, vector<128x128xf32>
    %cst_9 = arith.constant dense<0.000000e+00> : vector<16x128xf32>
    %16 = tpu.matmul %1, %15, %cst_9 {dimension_numbers = #tpu.dot_dimension_numbers<[1], [0], [0], [1], [0, 0, 1, 1], [], []>} : vector<16x128xf32>, vector<128x128xf32>, vector<16x128xf32> -> vector<16x128xf32>
    %c0_10 = arith.constant 0 : index
    %c0_11 = arith.constant 0 : index
    %17 = vector.load %arg6[%c0_10, %c0_11] : memref<1x128xf32, #tpu.memory_space<vmem>>, vector<1x128xf32>
    %18 = vector.broadcast %17 : vector<1x128xf32> to vector<16x128xf32>
    %19 = arith.addf %16, %18 : vector<16x128xf32>
    %cst_12 = arith.constant dense<0xFF800000> : vector<16xf32>
    %20 = vector.multi_reduction <maximumf>, %19, %cst_12 [1] : vector<16x128xf32> to vector<16xf32>
    %21 = vector.shape_cast %20 : vector<16xf32> to vector<16x1xf32>
    %22 = vector.broadcast %21 : vector<16x1xf32> to vector<16x128xf32>
    %23 = arith.subf %19, %22 : vector<16x128xf32>
    %24 = math.exp %23 : vector<16x128xf32>
    %cst_13 = arith.constant dense<0.000000e+00> : vector<16xf32>
    %25 = vector.multi_reduction <add>, %24, %cst_13 [1] : vector<16x128xf32> to vector<16xf32>
    %26 = vector.shape_cast %25 : vector<16xf32> to vector<16x1xf32>
    %27 = tpu.reciprocal %26 {approx = true} : vector<16x1xf32> -> vector<16x1xf32>
    %28 = vector.broadcast %27 : vector<16x1xf32> to vector<16x128xf32>
    %29 = arith.mulf %24, %28 : vector<16x128xf32>
    %30 = vector.broadcast %14 : vector<16x1xf32> to vector<16x256xf32>
    %31 = arith.mulf %30, %0 : vector<16x256xf32>
    %c0_14 = arith.constant 0 : index
    %c0_15 = arith.constant 0 : index
    %32 = vector.load %arg7[%c0_14, %c0_15] : memref<16x384xf32, #tpu.memory_space<vmem>>, vector<16x256xf32>
    tpu.vector_store %arg7[%c0_14, %c0_15], %31 {strides = array<i32>} : memref<16x384xf32, #tpu.memory_space<vmem>>, vector<16x256xf32>,
    %33 = arith.mulf %29, %1 : vector<16x128xf32>
    %c0_16 = arith.constant 0 : index
    %c256 = arith.constant 256 : index
    %34 = vector.load %arg7[%c0_16, %c256] : memref<16x384xf32, #tpu.memory_space<vmem>>, vector<16x128xf32>
    tpu.vector_store %arg7[%c0_16, %c256], %33 {strides = array<i32>} : memref<16x384xf32, #tpu.memory_space<vmem>>, vector<16x128xf32>,
    %c0_17 = arith.constant 0 : index
    %c0_18 = arith.constant 0 : index
    %35 = vector.load %arg8[%c0_17, %c0_18] : memref<16x128xf32, #tpu.memory_space<vmem>>, vector<16x128xf32>
    tpu.vector_store %arg8[%c0_17, %c0_18], %29 {strides = array<i32>} : memref<16x128xf32, #tpu.memory_space<vmem>>, vector<16x128xf32>,
    %c0_19 = arith.constant 0 : index
    %c0_20 = arith.constant 0 : index
    %36 = vector.load %arg9[%c0_19, %c0_20] : memref<16x1xf32, #tpu.memory_space<vmem>>, vector<16x1xf32>
    tpu.vector_store %arg9[%c0_19, %c0_20], %14 {strides = array<i32>} : memref<16x1xf32, #tpu.memory_space<vmem>>, vector<16x1xf32>,
    return
  }
  func.func @transform_0(%arg0: i32) -> (i32, i32) {
    %c0_i32 = arith.constant 0 : i32
    %c0_i32_0 = arith.constant 0 : i32
    return %arg0, %c0_i32 : i32, i32
  }
  func.func @transform_1(%arg0: i32) -> (i32, i32) {
    %c0_i32 = arith.constant 0 : i32
    %c0_i32_0 = arith.constant 0 : i32
    return %arg0, %c0_i32 : i32, i32
  }
  func.func @transform_2(%arg0: i32) -> (i32, i32) {
    %c0_i32 = arith.constant 0 : i32
    %c0_i32_0 = arith.constant 0 : i32
    %c0_i32_1 = arith.constant 0 : i32
    return %c0_i32, %c0_i32_0 : i32, i32
  }
  func.func @transform_3(%arg0: i32) -> i32 {
    %c0_i32 = arith.constant 0 : i32
    %c0_i32_0 = arith.constant 0 : i32
    return %c0_i32 : i32
  }
  func.func @transform_4(%arg0: i32) -> (i32, i32) {
    %c0_i32 = arith.constant 0 : i32
    %c0_i32_0 = arith.constant 0 : i32
    %c0_i32_1 = arith.constant 0 : i32
    return %c0_i32, %c0_i32_0 : i32, i32
  }
  func.func @transform_5(%arg0: i32) -> (i32, i32) {
    %c0_i32 = arith.constant 0 : i32
    %c0_i32_0 = arith.constant 0 : i32
    %c0_i32_1 = arith.constant 0 : i32
    return %c0_i32, %c0_i32_0 : i32, i32
  }
  func.func @transform_6(%arg0: i32) -> (i32, i32) {
    %c0_i32 = arith.constant 0 : i32
    %c0_i32_0 = arith.constant 0 : i32
    return %arg0, %c0_i32 : i32, i32
  }
  func.func @transform_7(%arg0: i32) -> (i32, i32) {
    %c0_i32 = arith.constant 0 : i32
    %c0_i32_0 = arith.constant 0 : i32
    return %arg0, %c0_i32 : i32, i32
  }
  func.func @transform_8(%arg0: i32) -> (i32, i32) {
    %c0_i32 = arith.constant 0 : i32
    %c0_i32_0 = arith.constant 0 : i32
    return %arg0, %c0_i32 : i32, i32
  }
}

module attributes {stable_mosaic.version = 11 : i64} {
  func.func @_mm_attn_kernel(%arg0: i32, %arg1: memref<16x256xf32, #tpu.memory_space<vmem>>, %arg2: memref<16x128xf32, #tpu.memory_space<vmem>>, %arg3: memref<1x256xf32, #tpu.memory_space<vmem>>, %arg4: memref<1xf32, #tpu.memory_space<smem>>, %arg5: memref<128x128xf32, #tpu.memory_space<vmem>>, %arg6: memref<1x128xf32, #tpu.memory_space<vmem>>, %arg7: memref<16x384xf32, #tpu.memory_space<vmem>>, %arg8: memref<16x128xf32, #tpu.memory_space<vmem>>, %arg9: memref<16x1xf32, #tpu.memory_space<vmem>>) attributes {dimension_semantics = [#tpu.dimension_semantics<parallel>], iteration_bounds = array<i64: 2>, scalar_prefetch = 0 : i64, scratch_operands = 0 : i64, tpu.core_type = #tpu.core_type<tc>, window_params = [{transform_indices = @transform_0, window_bounds = array<i64: 16, 256>}, {transform_indices = @transform_1, window_bounds = array<i64: 16, 128>}, {pipeline_mode = #tpu.pipeline_mode<synchronous>, transform_indices = @transform_2, window_bounds = array<i64: 1, 256>}, {transform_indices = @transform_3, window_bounds = array<i64: 1>}, {pipeline_mode = #tpu.pipeline_mode<synchronous>, transform_indices = @transform_4, window_bounds = array<i64: 128, 128>}, {pipeline_mode = #tpu.pipeline_mode<synchronous>, transform_indices = @transform_5, window_bounds = array<i64: 1, 128>}, {transform_indices = @transform_6, window_bounds = array<i64: 16, 384>}, {transform_indices = @transform_7, window_bounds = array<i64: 16, 128>}, {transform_indices = @transform_8, window_bounds = array<i64: 16, 1>}]} {
    %c0 = arith.constant 0 : index
    %c0_0 = arith.constant 0 : index
    %0 = vector.load %arg1[%c0, %c0_0] : memref<16x256xf32, #tpu.memory_space<vmem>>, vector<16x256xf32>
    %c0_1 = arith.constant 0 : index
    %c0_2 = arith.constant 0 : index
    %1 = vector.load %arg2[%c0_1, %c0_2] : memref<16x128xf32, #tpu.memory_space<vmem>>, vector<16x128xf32>
    %c0_3 = arith.constant 0 : index
    %c0_4 = arith.constant 0 : index
    %2 = vector.load %arg3[%c0_3, %c0_4] : memref<1x256xf32, #tpu.memory_space<vmem>>, vector<1x256xf32>
    %3 = vector.broadcast %2 : vector<1x256xf32> to vector<16x256xf32>
    %4 = arith.mulf %0, %3 : vector<16x256xf32>
    %cst = arith.constant dense<0.000000e+00> : vector<16xf32>
    %5 = vector.multi_reduction <add>, %4, %cst [1] : vector<16x256xf32> to vector<16xf32>
    %6 = vector.shape_cast %5 : vector<16xf32> to vector<16x1xf32>
    %c0_5 = arith.constant 0 : index
    %7 = memref.load %arg4[%c0_5] : memref<1xf32, #tpu.memory_space<smem>>
    %8 = vector.broadcast %7 : f32 to vector<16x1xf32>
    %9 = arith.addf %6, %8 : vector<16x1xf32>
    %10 = arith.negf %9 : vector<16x1xf32>
    %11 = math.exp %10 : vector<16x1xf32>
    %cst_6 = arith.constant 1.000000e+00 : f32
    %12 = vector.broadcast %cst_6 : f32 to vector<16x1xf32>
    %13 = arith.addf %12, %11 : vector<16x1xf32>
    %14 = arith.divf %12, %13 : vector<16x1xf32>
    %c0_7 = arith.constant 0 : index
    %c0_8 = arith.constant 0 : index
    %15 = vector.load %arg5[%c0_7, %c0_8] : memref<128x128xf32, #tpu.memory_space<vmem>>, vector<128x128xf32>
    %cst_9 = arith.constant dense<0.000000e+00> : vector<16x128xf32>
    %16 = tpu.matmul %1, %15, %cst_9 {dimension_numbers = #tpu.dot_dimension_numbers<[1], [0], [0], [1], [0, 0, 1, 1], [], []>} : vector<16x128xf32>, vector<128x128xf32>, vector<16x128xf32> -> vector<16x128xf32>
    %c0_10 = arith.constant 0 : index
    %c0_11 = arith.constant 0 : index
    %17 = vector.load %arg6[%c0_10, %c0_11] : memref<1x128xf32, #tpu.memory_space<vmem>>, vector<1x128xf32>
    %18 = vector.broadcast %17 : vector<1x128xf32> to vector<16x128xf32>
    %19 = arith.addf %16, %18 : vector<16x128xf32>
    %cst_12 = arith.constant dense<0xFF800000> : vector<16xf32>
    %20 = vector.multi_reduction <maximumf>, %19, %cst_12 [1] : vector<16x128xf32> to vector<16xf32>
    %21 = vector.shape_cast %20 : vector<16xf32> to vector<16x1xf32>
    %22 = vector.broadcast %21 : vector<16x1xf32> to vector<16x128xf32>
    %23 = arith.subf %19, %22 : vector<16x128xf32>
    %24 = math.exp %23 : vector<16x128xf32>
    %cst_13 = arith.constant dense<0.000000e+00> : vector<16xf32>
    %25 = vector.multi_reduction <add>, %24, %cst_13 [1] : vector<16x128xf32> to vector<16xf32>
    %26 = vector.shape_cast %25 : vector<16xf32> to vector<16x1xf32>
    %27 = tpu.reciprocal %26 {approx = true} : vector<16x1xf32> -> vector<16x1xf32>
    %28 = vector.broadcast %27 : vector<16x1xf32> to vector<16x128xf32>
    %29 = arith.mulf %24, %28 : vector<16x128xf32>
    %30 = vector.broadcast %14 : vector<16x1xf32> to vector<16x256xf32>
    %31 = arith.mulf %30, %0 : vector<16x256xf32>
    %c0_14 = arith.constant 0 : index
    %c0_15 = arith.constant 0 : index
    %32 = vector.load %arg7[%c0_14, %c0_15] : memref<16x384xf32, #tpu.memory_space<vmem>>, vector<16x256xf32>
    tpu.vector_store %arg7[%c0_14, %c0_15], %31 {strides = array<i32>} : memref<16x384xf32, #tpu.memory_space<vmem>>, vector<16x256xf32>,
    %33 = arith.mulf %29, %1 : vector<16x128xf32>
    %c0_16 = arith.constant 0 : index
    %c256 = arith.constant 256 : index
    %34 = vector.load %arg7[%c0_16, %c256] : memref<16x384xf32, #tpu.memory_space<vmem>>, vector<16x128xf32>
    tpu.vector_store %arg7[%c0_16, %c256], %33 {strides = array<i32>} : memref<16x384xf32, #tpu.memory_space<vmem>>, vector<16x128xf32>,
    %c0_17 = arith.constant 0 : index
    %c0_18 = arith.constant 0 : index
    %35 = vector.load %arg8[%c0_17, %c0_18] : memref<16x128xf32, #tpu.memory_space<vmem>>, vector<16x128xf32>
    tpu.vector_store %arg8[%c0_17, %c0_18], %29 {strides = array<i32>} : memref<16x128xf32, #tpu.memory_space<vmem>>, vector<16x128xf32>,
    %c0_19 = arith.constant 0 : index
    %c0_20 = arith.constant 0 : index
    %36 = vector.load %arg9[%c0_19, %c0_20] : memref<16x1xf32, #tpu.memory_space<vmem>>, vector<16x1xf32>
    tpu.vector_store %arg9[%c0_19, %c0_20], %14 {strides = array<i32>} : memref<16x1xf32, #tpu.memory_space<vmem>>, vector<16x1xf32>,
    return
  }
  func.func @transform_0(%arg0: i32) -> (i32, i32) {
    %c0_i32 = arith.constant 0 : i32
    %c0_i32_0 = arith.constant 0 : i32
    return %arg0, %c0_i32 : i32, i32
  }
  func.func @transform_1(%arg0: i32) -> (i32, i32) {
    %c0_i32 = arith.constant 0 : i32
    %c0_i32_0 = arith.constant 0 : i32
    return %arg0, %c0_i32 : i32, i32
  }
  func.func @transform_2(%arg0: i32) -> (i32, i32) {
    %c0_i32 = arith.constant 0 : i32
    %c0_i32_0 = arith.constant 0 : i32
    %c0_i32_1 = arith.constant 0 : i32
    return %c0_i32, %c0_i32_0 : i32, i32
  }
  func.func @transform_3(%arg0: i32) -> i32 {
    %c0_i32 = arith.constant 0 : i32
    %c0_i32_0 = arith.constant 0 : i32
    return %c0_i32 : i32
  }
  func.func @transform_4(%arg0: i32) -> (i32, i32) {
    %c0_i32 = arith.constant 0 : i32
    %c0_i32_0 = arith.constant 0 : i32
    %c0_i32_1 = arith.constant 0 : i32
    return %c0_i32, %c0_i32_0 : i32, i32
  }
  func.func @transform_5(%arg0: i32) -> (i32, i32) {
    %c0_i32 = arith.constant 0 : i32
    %c0_i32_0 = arith.constant 0 : i32
    %c0_i32_1 = arith.constant 0 : i32
    return %c0_i32, %c0_i32_0 : i32, i32
  }
  func.func @transform_6(%arg0: i32) -> (i32, i32) {
    %c0_i32 = arith.constant 0 : i32
    %c0_i32_0 = arith.constant 0 : i32
    return %arg0, %c0_i32 : i32, i32
  }
  func.func @transform_7(%arg0: i32) -> (i32, i32) {
    %c0_i32 = arith.constant 0 : i32
    %c0_i32_0 = arith.constant 0 : i32
    return %arg0, %c0_i32 : i32, i32
  }
  func.func @transform_8(%arg0: i32) -> (i32, i32) {
    %c0_i32 = arith.constant 0 : i32
    %c0_i32_0 = arith.constant 0 : i32
    return %arg0, %c0_i32 : i32, i32
  }
}

</mosaic_0001>

<llo_original>
// kernel: _multimodal_attention_impl.1
$region0: #{_multimodal_attention_impl.1}
  #allocation0 [shape = 'u32[]', space=smem, size = 0x4, offset = 0x4, fixed_abs, tag = 'smem constant byte address 0x4 - core index']
  #allocation1 [shape = 'u32[72,128]{1,0:T(1,128)}', space=vmem, size = 0x9000, scoped, tag = 'internal scratch']
  #allocation2 [shape = 'f32[1]{0:T(128)S(6)}', space=smem, size = 0x200, scoped, tag = 'scoped memory for _multimodal_attention_impl.1']
  %s0 = inlined_call_operand.hbm [shape: f32[32,256], index: 0, kind: input, shape index: {}]
  %s1 = inlined_call_operand.hbm [shape: f32[32,128], index: 1, kind: input, shape index: {}]
  %s2 = inlined_call_operand.vmem [shape: f32[1,256], index: 2, kind: input, shape index: {}]
  %s3 = inlined_call_operand.<no memory space> [shape: f32[1], index: 3, kind: input, shape index: {}]
  %s4 = inlined_call_operand.hbm [shape: f32[128,128], index: 4, kind: input, shape index: {}]
  %s5 = inlined_call_operand.vmem [shape: f32[1,128], index: 5, kind: input, shape index: {}]
  %s6 = inlined_call_operand.hbm [shape: f32[32,384], index: 6, kind: output, shape index: {0}]
  %s7 = inlined_call_operand.hbm [shape: f32[32,128], index: 7, kind: output, shape index: {1}]
  %s8 = inlined_call_operand.vmem [shape: f32[32,1], index: 8, kind: output, shape index: {2}]
  %9 = xla_tuple %s6, %s7, %s8
  %s10 = sld [smem:[#allocation0]]
  $region85: #{_multimodal_attention_impl.1} parent=0
    _
  %s12 = ssub.s32 1, %s10
  %s13 = scalar_select 0, %s12, %s10
  %14 = sst [smem:[#allocation2]] %s3
  $region1: #{_multimodal_attention_impl.1} parent=0
    #allocation3 [shape = 'u8[32768]{0}', space=vmem, size = 0x8000, scoped, tag = 'input window, operand 0']
    #allocation4 [shape = 's32[2]{0}', space=sflag, size = 0x8, scoped, tag = 'scoped memory for _multimodal_attention_impl.1']
    #allocation5 [shape = 's32[2]{0}', space=sflag, size = 0x8, scoped, tag = 'scoped memory for _multimodal_attention_impl.1']
    #allocation6 [shape = 'u8[16384]{0}', space=vmem, size = 0x4000, scoped, tag = 'input window, operand 1']
    #allocation7 [shape = 's32[2]{0}', space=sflag, size = 0x8, scoped, tag = 'scoped memory for _multimodal_attention_impl.1']
    #allocation8 [shape = 'u8[65536]{0}', space=vmem, size = 0x10000, scoped, tag = 'input window, operand 4, single buffered']
    #allocation9 [shape = 'u8[49152]{0}', space=vmem, size = 0xc000, scoped, tag = 'output window, operand 0']
    #allocation10 [shape = 'u8[16384]{0}', space=vmem, size = 0x4000, scoped, tag = 'output window, operand 1']
    #allocation11 [shape = 's32[2]{0}', space=sflag, size = 0x8, scoped, tag = 'scoped memory for _multimodal_attention_impl.1']
    %15 = vsyncpa [#allocation4], 0
    %s16 = scalar_lea.sflag [#allocation4], 1
    %17 = vsyncpa %s16, 0
    %18 = vsyncpa [#allocation7], 0
    %s19 = scalar_lea.sflag [#allocation7], 1
    %20 = vsyncpa %s19, 0
    %21 = vsyncpa [#allocation5], 0
    %s22 = scalar_lea.sflag [#allocation5], 1
    %23 = vsyncpa %s22, 0
    %24 = vsyncpa [#allocation11], 0
    %s25 = scalar_lea.sflag [#allocation11], 1
    %26 = vsyncpa %s25, 0
    loop: start=0, step=1, limit=4
    $region2: #{_multimodal_attention_impl.1} parent=1 // loop_pre_header
      _
    $region3: #{_multimodal_attention_impl.1} parent=1 // loop_header
      %s28 = sphi 0, %s32
      %p29 = scmp.ge.s32.totalorder %s28, 4
      %s38 = sphi 0, %s40
      %s41 = sphi 0, %s38
      %s42 = sphi 0, %s41
      %s58 = sphi 0, %s42
      %s64 = sphi 0, %s66
      %s67 = sphi 0, %s64
      %s68 = sphi 0, %s67
      %s84 = sphi 0, %s68
      %s88 = sphi 0, %s88
      %s90 = sphi 0, %s88
      %s91 = sphi 0, %s90
      %s105 = sphi 0, %s91
      %s109 = sphi 0, %s109
      %s111 = sphi 0, %s109
      %s112 = sphi 0, %s111
      %s126 = sphi 0, %s112
      %s130 = sphi 0, %s130
      %s132 = sphi 0, %s130
      %s133 = sphi 0, %s132
      %s147 = sphi 0, %s133
      %s151 = sphi 0, %s151
      %s153 = sphi 0, %s151
      %s154 = sphi 0, %s153
      %s168 = sphi 0, %s154
      %s174 = sphi 0, %s176
      %s177 = sphi 0, %s174
      %s178 = sphi 0, %s177
      %s194 = sphi 0, %s178
      %s200 = sphi 0, %s202
      %s203 = sphi 0, %s200
      %s204 = sphi 0, %s203
      %s220 = sphi 0, %s204
      %s226 = sphi 0, %s228
      %s229 = sphi 0, %s226
      %s230 = sphi 0, %s229
      %s246 = sphi 0, %s230
    $region4: #{_multimodal_attention_impl.1} parent=1 // loop_header_branch
      %31 = sbr.rel (%p29) target = $region8
    $region5: #{_multimodal_attention_impl.1} parent=1 // loop_body
      %s33 = ssub.s32 %s28, 1
      %s34 = ssub.s32 %s28, 2
      %s35 = sadd.s32 %s28, 1
      %s36 = ssub.s32 %s28, %s35
      %p37 = scmp.eq.s32.totalorder %s36, 0
      %s39 = sadd.s32 %s38, 1
      %s40 = scalar_select %p37, %s38, %s39
      %p43 = pneg %p37
      %p44 = scmp.eq.s32.totalorder %s28, 1
      %p45 = por %p43, %p44
      %p46 = scmp.ne.s32.totalorder %s38, %s41
      %p47 = scmp.eq.s32.totalorder %s28, 0
      %p48 = por %p46, %p47
      %p49 = scmp.ne.s32.totalorder %s38, %s41
      %p50 = scmp.eq.s32.totalorder %s33, 1
      %p51 = por %p49, %p50
      %p52 = scmp.ne.s32.totalorder %s41, %s42
      %p53 = scmp.eq.s32.totalorder %s33, 0
      %p54 = por %p52, %p53
      %p55 = scmp.ne.s32.totalorder %s41, %s42
      %p56 = scmp.eq.s32.totalorder %s34, 1
      %p57 = por %p55, %p56
      %p59 = scmp.ne.s32.totalorder %s42, %s58
      %p60 = scmp.eq.s32.totalorder %s34, 0
      %p61 = por %p59, %p60
      %s62 = ssub.s32 %s28, %s35
      %p63 = scmp.eq.s32.totalorder %s62, 0
      %s65 = sadd.s32 %s64, 1
      %s66 = scalar_select %p63, %s64, %s65
      %p69 = pneg %p63
      %p70 = scmp.eq.s32.totalorder %s28, 1
      %p71 = por %p69, %p70
      %p72 = scmp.ne.s32.totalorder %s64, %s67
      %p73 = scmp.eq.s32.totalorder %s28, 0
      %p74 = por %p72, %p73
      %p75 = scmp.ne.s32.totalorder %s64, %s67
      %p76 = scmp.eq.s32.totalorder %s33, 1
      %p77 = por %p75, %p76
      %p78 = scmp.ne.s32.totalorder %s67, %s68
      %p79 = scmp.eq.s32.totalorder %s33, 0
      %p80 = por %p78, %p79
      %p81 = scmp.ne.s32.totalorder %s67, %s68
      %p82 = scmp.eq.s32.totalorder %s34, 1
      %p83 = por %p81, %p82
      %p85 = scmp.ne.s32.totalorder %s68, %s84
      %p86 = scmp.eq.s32.totalorder %s34, 0
      %p87 = por %p85, %p86
      %s89 = sadd.s32 %s88, 1
      %p92 = scmp.eq.s32.totalorder %s28, 1
      %p93 = scmp.ne.s32.totalorder %s88, %s90
      %p94 = scmp.eq.s32.totalorder %s28, 0
      %p95 = por %p93, %p94
      %p96 = scmp.ne.s32.totalorder %s88, %s90
      %p97 = scmp.eq.s32.totalorder %s33, 1
      %p98 = por %p96, %p97
      %p99 = scmp.ne.s32.totalorder %s90, %s91
      %p100 = scmp.eq.s32.totalorder %s33, 0
      %p101 = por %p99, %p100
      %p102 = scmp.ne.s32.totalorder %s90, %s91
      %p103 = scmp.eq.s32.totalorder %s34, 1
      %p104 = por %p102, %p103
      %p106 = scmp.ne.s32.totalorder %s91, %s105
      %p107 = scmp.eq.s32.totalorder %s34, 0
      %p108 = por %p106, %p107
      %s110 = sadd.s32 %s109, 1
      %p113 = scmp.eq.s32.totalorder %s28, 1
      %p114 = scmp.ne.s32.totalorder %s109, %s111
      %p115 = scmp.eq.s32.totalorder %s28, 0
      %p116 = por %p114, %p115
      %p117 = scmp.ne.s32.totalorder %s109, %s111
      %p118 = scmp.eq.s32.totalorder %s33, 1
      %p119 = por %p117, %p118
      %p120 = scmp.ne.s32.totalorder %s111, %s112
      %p121 = scmp.eq.s32.totalorder %s33, 0
      %p122 = por %p120, %p121
      %p123 = scmp.ne.s32.totalorder %s111, %s112
      %p124 = scmp.eq.s32.totalorder %s34, 1
      %p125 = por %p123, %p124
      %p127 = scmp.ne.s32.totalorder %s112, %s126
      %p128 = scmp.eq.s32.totalorder %s34, 0
      %p129 = por %p127, %p128
      %s131 = sadd.s32 %s130, 1
      %p134 = scmp.eq.s32.totalorder %s28, 1
      %p135 = scmp.ne.s32.totalorder %s130, %s132
      %p136 = scmp.eq.s32.totalorder %s28, 0
      %p137 = por %p135, %p136
      %p138 = scmp.ne.s32.totalorder %s130, %s132
      %p139 = scmp.eq.s32.totalorder %s33, 1
      %p140 = por %p138, %p139
      %p141 = scmp.ne.s32.totalorder %s132, %s133
      %p142 = scmp.eq.s32.totalorder %s33, 0
      %p143 = por %p141, %p142
      %p144 = scmp.ne.s32.totalorder %s132, %s133
      %p145 = scmp.eq.s32.totalorder %s34, 1
      %p146 = por %p144, %p145
      %p148 = scmp.ne.s32.totalorder %s133, %s147
      %p149 = scmp.eq.s32.totalorder %s34, 0
      %p150 = por %p148, %p149
      %s152 = sadd.s32 %s151, 1
      %p155 = scmp.eq.s32.totalorder %s28, 1
      %p156 = scmp.ne.s32.totalorder %s151, %s153
      %p157 = scmp.eq.s32.totalorder %s28, 0
      %p158 = por %p156, %p157
      %p159 = scmp.ne.s32.totalorder %s151, %s153
      %p160 = scmp.eq.s32.totalorder %s33, 1
      %p161 = por %p159, %p160
      %p162 = scmp.ne.s32.totalorder %s153, %s154
      %p163 = scmp.eq.s32.totalorder %s33, 0
      %p164 = por %p162, %p163
      %p165 = scmp.ne.s32.totalorder %s153, %s154
      %p166 = scmp.eq.s32.totalorder %s34, 1
      %p167 = por %p165, %p166
      %p169 = scmp.ne.s32.totalorder %s154, %s168
      %p170 = scmp.eq.s32.totalorder %s34, 0
      %p171 = por %p169, %p170
      %s172 = ssub.s32 %s28, %s35
      %p173 = scmp.eq.s32.totalorder %s172, 0
      %s175 = sadd.s32 %s174, 1
      %s176 = scalar_select %p173, %s174, %s175
      %p179 = pneg %p173
      %p180 = scmp.eq.s32.totalorder %s28, 1
      %p181 = por %p179, %p180
      %p182 = scmp.ne.s32.totalorder %s174, %s177
      %p183 = scmp.eq.s32.totalorder %s28, 0
      %p184 = por %p182, %p183
      %p185 = scmp.ne.s32.totalorder %s174, %s177
      %p186 = scmp.eq.s32.totalorder %s33, 1
      %p187 = por %p185, %p186
      %p188 = scmp.ne.s32.totalorder %s177, %s178
      %p189 = scmp.eq.s32.totalorder %s33, 0
      %p190 = por %p188, %p189
      %p191 = scmp.ne.s32.totalorder %s177, %s178
      %p192 = scmp.eq.s32.totalorder %s34, 1
      %p193 = por %p191, %p192
      %p195 = scmp.ne.s32.totalorder %s178, %s194
      %p196 = scmp.eq.s32.totalorder %s34, 0
      %p197 = por %p195, %p196
      %s198 = ssub.s32 %s28, %s35
      %p199 = scmp.eq.s32.totalorder %s198, 0
      %s201 = sadd.s32 %s200, 1
      %s202 = scalar_select %p199, %s200, %s201
      %p205 = pneg %p199
      %p206 = scmp.eq.s32.totalorder %s28, 1
      %p207 = por %p205, %p206
      %p208 = scmp.ne.s32.totalorder %s200, %s203
      %p209 = scmp.eq.s32.totalorder %s28, 0
      %p210 = por %p208, %p209
      %p211 = scmp.ne.s32.totalorder %s200, %s203
      %p212 = scmp.eq.s32.totalorder %s33, 1
      %p213 = por %p211, %p212
      %p214 = scmp.ne.s32.totalorder %s203, %s204
      %p215 = scmp.eq.s32.totalorder %s33, 0
      %p216 = por %p214, %p215
      %p217 = scmp.ne.s32.totalorder %s203, %s204
      %p218 = scmp.eq.s32.totalorder %s34, 1
      %p219 = por %p217, %p218
      %p221 = scmp.ne.s32.totalorder %s204, %s220
      %p222 = scmp.eq.s32.totalorder %s34, 0
      %p223 = por %p221, %p222
      %s224 = ssub.s32 %s28, %s35
      %p225 = scmp.eq.s32.totalorder %s224, 0
      %s227 = sadd.s32 %s226, 1
      %s228 = scalar_select %p225, %s226, %s227
      %p231 = pneg %p225
      %p232 = scmp.eq.s32.totalorder %s28, 1
      %p233 = por %p231, %p232
      %p234 = scmp.ne.s32.totalorder %s226, %s229
      %p235 = scmp.eq.s32.totalorder %s28, 0
      %p236 = por %p234, %p235
      %p237 = scmp.ne.s32.totalorder %s226, %s229
      %p238 = scmp.eq.s32.totalorder %s33, 1
      %p239 = por %p237, %p238
      %p240 = scmp.ne.s32.totalorder %s229, %s230
      %p241 = scmp.eq.s32.totalorder %s33, 0
      %p242 = por %p240, %p241
      %p243 = scmp.ne.s32.totalorder %s229, %s230
      %p244 = scmp.eq.s32.totalorder %s34, 1
      %p245 = por %p243, %p244
      %p247 = scmp.ne.s32.totalorder %s230, %s246
      %p248 = scmp.eq.s32.totalorder %s34, 0
      %p249 = por %p247, %p248
      %p250 = scmp.le.s32.totalorder 1, %s28
      %p251 = scmp.lt.s32.totalorder %s28, 3
      %p252 = pnand %p250, %p251
      %p253 = pneg %p252
      // Predicated region
      $region9: #{_multimodal_attention_impl.1} parent=5 // pred_check
        _
      $region10: #{_multimodal_attention_impl.1} parent=5 // pred_check_branch
        %255 = sbr.rel (%p252) target = $region12
      $region11: #{_multimodal_attention_impl.1} parent=5 // pred_region
        %s256 = ssub.s32 %s28, 1
        // Predicated region
        $region13: #{_multimodal_attention_impl.1} parent=11 // pred_check
          %p257 = pneg %p101
        $region14: #{_multimodal_attention_impl.1} parent=11 // pred_check_branch
          %259 = sbr.rel (%p257) target = $region16
        $region15: #{_multimodal_attention_impl.1} parent=11 // pred_region
          _
        $region16: #{_multimodal_attention_impl.1} parent=11 // pred_fallthru
          _
        // Predicated region
        $region17: #{_multimodal_attention_impl.1} parent=11 // pred_check
          %p260 = pneg %p122
        $region18: #{_multimodal_attention_impl.1} parent=11 // pred_check_branch
          %262 = sbr.rel (%p260) target = $region20
        $region19: #{_multimodal_attention_impl.1} parent=11 // pred_region
          _
        $region20: #{_multimodal_attention_impl.1} parent=11 // pred_fallthru
          _
        // Predicated region
        $region21: #{_multimodal_attention_impl.1} parent=11 // pred_check
          %p263 = pneg %p143
        $region22: #{_multimodal_attention_impl.1} parent=11 // pred_check_branch
          %265 = sbr.rel (%p263) target = $region24
        $region23: #{_multimodal_attention_impl.1} parent=11 // pred_region
          %267 = vsyncadd [#allocation7], 0
          %s268 = sshll.u32 %s4, 4
          %s269 = int_to_ptr.hbm [resolvable:$true] %s268
          %s270 = sshll.u32 [#allocation8], 4
          %s271 = int_to_ptr.vmem [resolvable:$true] %s270
          %276 = dma.hbm_to_vmem [thread:$0]  %s269, 2048, %s271, [#allocation7], 128, 128, 8
        $region24: #{_multimodal_attention_impl.1} parent=11 // pred_fallthru
          _
        // Predicated region
        $region25: #{_multimodal_attention_impl.1} parent=11 // pred_check
          %p277 = pneg %p164
        $region26: #{_multimodal_attention_impl.1} parent=11 // pred_check_branch
          %279 = sbr.rel (%p277) target = $region28
        $region27: #{_multimodal_attention_impl.1} parent=11 // pred_region
          _
        $region28: #{_multimodal_attention_impl.1} parent=11 // pred_fallthru
          _
      $region12: #{_multimodal_attention_impl.1} parent=5 // pred_fallthru
        _
      %p280 = scmp.lt.s32.totalorder %s28, 2
      // Predicated region
      $region29: #{_multimodal_attention_impl.1} parent=5 // pred_check
        %p281 = pneg %p280
      $region30: #{_multimodal_attention_impl.1} parent=5 // pred_check_branch
        %283 = sbr.rel (%p281) target = $region32
      $region31: #{_multimodal_attention_impl.1} parent=5 // pred_region
        // Predicated region
        $region33: #{_multimodal_attention_impl.1} parent=31 // pred_check
          %p284 = pneg %p48
        $region34: #{_multimodal_attention_impl.1} parent=31 // pred_check_branch
          %286 = sbr.rel (%p284) target = $region36
        $region35: #{_multimodal_attention_impl.1} parent=31 // pred_region
          %s287 = sand.u32 %s38, 1
          %s288 = scalar_lea.sflag [#allocation4], %s287
          %s289 = sand.u32 %s38, 1
          %s290 = smul.addr %s289, 32
          %s291 = scalar_lea.vmem [#allocation3], %s290
          %s292 = smul.u32 2, %s28
          %294 = vsyncadd %s288, 0
          %s295 = smul.addr %s292, 2
          %s296 = smul.addr %s295, 8
          %s297 = scalar_lea.hbm %s0, %s296
          %s298 = sshll.u32 %s297, 4
          %s299 = int_to_ptr.hbm [resolvable:$true] %s298
          %s300 = sshll.u32 %s291, 4
          %s301 = int_to_ptr.vmem [resolvable:$true] %s300
          %306 = dma.hbm_to_vmem [thread:$0]  %s299, 512, %s301, %s288, 256, 256, 16
        $region36: #{_multimodal_attention_impl.1} parent=31 // pred_fallthru
          _
        // Predicated region
        $region37: #{_multimodal_attention_impl.1} parent=31 // pred_check
          %p307 = pneg %p74
        $region38: #{_multimodal_attention_impl.1} parent=31 // pred_check_branch
          %309 = sbr.rel (%p307) target = $region40
        $region39: #{_multimodal_attention_impl.1} parent=31 // pred_region
          %s310 = sand.u32 %s28, 1
          %s311 = scalar_lea.sflag [#allocation7], %s310
          %s312 = sand.u32 %s64, 1
          %s313 = smul.addr %s312, 16
          %s314 = scalar_lea.vmem [#allocation6], %s313
          %s315 = smul.u32 2, %s28
          %317 = vsyncadd %s311, 0
          %s318 = smul.addr %s315, 8
          %s319 = scalar_lea.hbm %s1, %s318
          %s320 = sshll.u32 %s319, 4
          %s321 = int_to_ptr.hbm [resolvable:$true] %s320
          %s322 = sshll.u32 %s314, 4
          %s323 = int_to_ptr.vmem [resolvable:$true] %s322
          %328 = dma.hbm_to_vmem [thread:$0]  %s321, 256, %s323, %s311, 128, 128, 8
        $region40: #{_multimodal_attention_impl.1} parent=31 // pred_fallthru
          _
      $region32: #{_multimodal_attention_impl.1} parent=5 // pred_fallthru
        _
      %p329 = scmp.le.s32.totalorder 1, %s28
      %p330 = scmp.lt.s32.totalorder %s28, 3
      %p331 = pnand %p329, %p330
      %p332 = pneg %p331
      // Predicated region
      $region41: #{_multimodal_attention_impl.1} parent=5 // pred_check
        _
      $region42: #{_multimodal_attention_impl.1} parent=5 // pred_check_branch
        %334 = sbr.rel (%p331) target = $region44
      $region43: #{_multimodal_attention_impl.1} parent=5 // pred_region
        %s335 = ssub.s32 %s28, 1
        %s336 = sand.u32 %s41, 1
        %s337 = scalar_lea.sflag [#allocation4], %s336
        %s338 = sand.u32 %s41, 1
        %s339 = smul.addr %s338, 32
        %s340 = scalar_lea.vmem [#allocation3], %s339
        // Predicated region
        $region45: #{_multimodal_attention_impl.1} parent=43 // pred_check
          %p341 = pneg %p54
        $region46: #{_multimodal_attention_impl.1} parent=43 // pred_check_branch
          %343 = sbr.rel (%p341) target = $region48
        $region47: #{_multimodal_attention_impl.1} parent=43 // pred_region
          %345 = dma.done %s337, 512
        $region48: #{_multimodal_attention_impl.1} parent=43 // pred_fallthru
          _
        %s346 = sand.u32 %s33, 1
        %s347 = scalar_lea.sflag [#allocation7], %s346
        %s348 = sand.u32 %s67, 1
        %s349 = smul.addr %s348, 16
        %s350 = scalar_lea.vmem [#allocation6], %s349
        // Predicated region
        $region49: #{_multimodal_attention_impl.1} parent=43 // pred_check
          %p351 = pneg %p80
        $region50: #{_multimodal_attention_impl.1} parent=43 // pred_check_branch
          %353 = sbr.rel (%p351) target = $region52
        $region51: #{_multimodal_attention_impl.1} parent=43 // pred_region
          %355 = dma.done %s347, 256
        $region52: #{_multimodal_attention_impl.1} parent=43 // pred_fallthru
          _
        // Predicated region
        $region53: #{_multimodal_attention_impl.1} parent=43 // pred_check
          %p356 = pneg %p143
        $region54: #{_multimodal_attention_impl.1} parent=43 // pred_check_branch
          %358 = sbr.rel (%p356) target = $region56
        $region55: #{_multimodal_attention_impl.1} parent=43 // pred_region
          %360 = dma.done [#allocation7], 2048
        $region56: #{_multimodal_attention_impl.1} parent=43 // pred_fallthru
          _
        %s361 = sand.u32 %s41, 1
        %s362 = scalar_lea.sflag [#allocation4], %s361
        %s363 = sand.u32 %s41, 1
        %s364 = smul.addr %s363, 32
        %s365 = scalar_lea.vmem [#allocation3], %s364
        %p366 = pneg %p54
        %p367 = pneg %p51
        %s368 = sand.u32 %s33, 1
        %s369 = scalar_lea.sflag [#allocation7], %s368
        %s370 = sand.u32 %s67, 1
        %s371 = smul.addr %s370, 16
        %s372 = scalar_lea.vmem [#allocation6], %s371
        %p373 = pneg %p80
        %p374 = pneg %p77
        %p375 = pneg %p101
        %p376 = pneg %p98
        %p377 = pneg %p122
        %p378 = pneg %p119
        %p379 = pneg %p143
        %p380 = pneg %p140
        %p381 = pneg %p164
        %p382 = pneg %p161
        %p383 = pneg %p190
        %p384 = pneg %p187
        %s385 = sand.u32 %s177, 1
        %s386 = scalar_lea.sflag [#allocation5], %s385
        %s387 = sand.u32 %s177, 1
        %s388 = smul.addr %s387, 48
        %s389 = scalar_lea.vmem [#allocation9], %s388
        %p390 = pneg %p216
        %p391 = pneg %p213
        %s392 = sand.u32 %s203, 1
        %s393 = scalar_lea.sflag [#allocation11], %s392
        %s394 = sand.u32 %s203, 1
        %s395 = smul.addr %s394, 16
        %s396 = scalar_lea.vmem [#allocation10], %s395
        %p397 = pneg %p242
        %p398 = pneg %p239
        %s399 = smul.u32 2, %s33
        %p400 = scmp.lt.s32.totalorder %s399, 3
        %s401 = scalar_select %p400, %s399, 3
        %s402 = smul.addr %s401, 8
        %s403 = scalar_lea.vmem %s8, %s402
        %s404 = smul.u32 2, %s33
        %s405 = smul.u32 2, %s33
        %s406 = smul.u32 2, %s33
        %s407 = smul.u32 2, %s33
        %s408 = smul.u32 2, %s33
        %p409 = scmp.lt.s32.totalorder %s408, 3
        %s410 = scalar_select %p409, %s408, 3
        %s411 = smul.addr %s410, 8
        %s412 = scalar_lea.vmem %s8, %s411
        %s413 = smul.u32 2, %s33
        %v414 = vld [vmem:[%s340] sm:$0xff]
        %v415 = vld [vmem:[%s340 + $0x8] sm:$0xff]
        %v416 = vld [vmem:[%s340 + $0x10] sm:$0xff]
        %v417 = vld [vmem:[%s340 + $0x18] sm:$0xff]
        %v418 = vld [vmem:[%s350] sm:$0xff]
        %v419 = vld [vmem:[%s350 + $0x8] sm:$0xff]
        %v420 = vld [vmem:[%s2] sm:$0x3]
        %v422 = vperm.slane %v420, 0
        %v423 = vperm.slane %v420, 1
        %v426 = vmul.f32 %v414, %v422
        %v427 = vmul.f32 %v415, %v423
        %v428 = vmul.f32 %v416, %v422
        %v429 = vmul.f32 %v417, %v423
        %v430 = vadd.f32 %v426, %v427
        %431 = vadd.xlane.f32.xlu0 %v430
        %v432 = vpop.xlane.xlu0 %431
        %v433 = vadd.f32 %v428, %v429
        %434 = vadd.xlane.f32.xlu0 %v433
        %v435 = vpop.xlane.xlu0 %434
        %s436 = sld [smem:[#allocation2]]
        %v437 = vstv %s436
        %v438 = vadd.f32 %v432, %v437
        %v439 = vadd.f32 %v435, %v437
        %v440 = vxor.u32 %v438, 2147483648
        %v441 = vxor.u32 %v439, 2147483648
        %v442 = vmul.f32 %v440, 1.442695
        %v443 = vpow.pop %v442
        %v444 = vmul.f32 %v441, 1.442695
        %v445 = vpow.pop %v444
        %v446 = vadd.f32 %v443, 1.0
        %v447 = vadd.f32 %v445, 1.0
        %v448 = vrcp.pop %v446
        %v449 = vmul.f32 %v446, %v448
        %v450 = vsub.f32 1.0, %v449
        %v451 = vmul.f32 %v448, %v450
        %v452 = vadd.f32 %v448, %v451
        %vm453 = vweird.f32 %v446
        %vm454 = vweird.f32 %v448
        %vm455 = vmor %vm453, %vm454
        %v456 = vsel %vm455, %v448, %v452
        %v457 = vand.u32 2147483647, %v446
        %vm458 = vcmp.eq.f32.partialorder %v457, 8.507059e+37
        %v459 = vand.u32 %v446, 2147483648
        %v460 = vor.u32 1.1754944e-38, %v459
        %v461 = vsel %vm458, %v460, %v456
        %v462 = vmul.f32 1.0, %v461
        %v463 = vrcp.pop %v447
        %v464 = vmul.f32 %v447, %v463
        %v465 = vsub.f32 1.0, %v464
        %v466 = vmul.f32 %v463, %v465
        %v467 = vadd.f32 %v463, %v466
        %vm468 = vweird.f32 %v447
        %vm469 = vweird.f32 %v463
        %vm470 = vmor %vm468, %vm469
        %v471 = vsel %vm470, %v463, %v467
        %v472 = vand.u32 2147483647, %v447
        %vm473 = vcmp.eq.f32.partialorder %v472, 8.507059e+37
        %v474 = vand.u32 %v447, 2147483648
        %v475 = vor.u32 1.1754944e-38, %v474
        %v476 = vsel %vm473, %v475, %v471
        %v477 = vmul.f32 1.0, %v476
        %v478 = vld [vmem:[#allocation8] sm:$0xff]
        %v479 = vld [vmem:[#allocation8 + $0x8] sm:$0xff]
        %v480 = vld [vmem:[#allocation8 + $0x10] sm:$0xff]
        %v481 = vld [vmem:[#allocation8 + $0x18] sm:$0xff]
        %v482 = vld [vmem:[#allocation8 + $0x20] sm:$0xff]
        %v483 = vld [vmem:[#allocation8 + $0x28] sm:$0xff]
        %v484 = vld [vmem:[#allocation8 + $0x30] sm:$0xff]
        %v485 = vld [vmem:[#allocation8 + $0x38] sm:$0xff]
        %v486 = vld [vmem:[#allocation8 + $0x40] sm:$0xff]
        %v487 = vld [vmem:[#allocation8 + $0x48] sm:$0xff]
        %v488 = vld [vmem:[#allocation8 + $0x50] sm:$0xff]
        %v489 = vld [vmem:[#allocation8 + $0x58] sm:$0xff]
        %v490 = vld [vmem:[#allocation8 + $0x60] sm:$0xff]
        %v491 = vld [vmem:[#allocation8 + $0x68] sm:$0xff]
        %v492 = vld [vmem:[#allocation8 + $0x70] sm:$0xff]
        %v493 = vld [vmem:[#allocation8 + $0x78] sm:$0xff]
        %v494 = vld [vmem:[%s5] sm:$0x1]
        %v496 = vperm.slane %v494, 0
        %498 = vmatpush.msra.mxu0 %v493
        %499 = vmatpush.msra.mxu0 %v492
        %500 = vmatpush.msra.mxu0 %v491
        %501 = vmatpush.msra.mxu0 %v490
        %502 = vmatpush.msra.mxu0 %v489
        %503 = vmatpush.msra.mxu0 %v488
        %504 = vmatpush.msra.mxu0 %v487
        %505 = vmatpush.msra.mxu0 %v486
        %506 = vmatpush.msra.mxu0 %v485
        %507 = vmatpush.msra.mxu0 %v484
        %508 = vmatpush.msra.mxu0 %v483
        %509 = vmatpush.msra.mxu0 %v482
        %510 = vmatpush.msra.mxu0 %v481
        %511 = vmatpush.msra.mxu0 %v480
        %512 = vmatpush.msra.mxu0 %v479
        %513 = vmatpush.msra.mxu0 %v478
        %514 = vmatmul.f32.gmra.mxu0 %v418
        %v515 = vpop.f32.mrf.mxu0
        %v516 = vadd.f32 %v496, %v515
        %517 = vmatmul.f32.gmra.mxu0 %v419
        %v518 = vpop.f32.mrf.mxu0
        %v519 = vadd.f32 %v496, %v518
        %520 = vdwg.mxu0
        %521 = vmax.xlane.f32.xlu0 %v516
        %v522 = vpop.xlane.xlu0 %521
        %523 = vmax.xlane.f32.xlu0 %v519
        %v524 = vpop.xlane.xlu0 %523
        %v525 = vsub.f32 %v516, %v522
        %v526 = vsub.f32 %v519, %v524
        %v527 = vmul.f32 %v525, 1.442695
        %v528 = vpow.pop %v527
        %v529 = vmul.f32 %v526, 1.442695
        %v530 = vpow.pop %v529
        %531 = vadd.xlane.f32.xlu0 %v528
        %v532 = vpop.xlane.xlu0 %531
        %533 = vadd.xlane.f32.xlu0 %v530
        %v534 = vpop.xlane.xlu0 %533
        %v535 = vrcp.pop %v532
        %v536 = vrcp.pop %v534
        %v537 = vmul.f32 %v528, %v535
        %v538 = vmul.f32 %v530, %v536
        %v539 = vmul.f32 %v462, %v414
        %v540 = vmul.f32 %v462, %v415
        %v541 = vmul.f32 %v477, %v416
        %v542 = vmul.f32 %v477, %v417
        %543 = vst [vmem:[%s389] sm:$0xff] %v539
        %544 = vst [vmem:[%s389 + $0x8] sm:$0xff] %v540
        %545 = vst [vmem:[%s389 + $0x18] sm:$0xff] %v541
        %546 = vst [vmem:[%s389 + $0x20] sm:$0xff] %v542
        %v547 = vmul.f32 %v537, %v418
        %v548 = vmul.f32 %v538, %v419
        %549 = vst [vmem:[%s389 + $0x10] sm:$0xff] %v547
        %550 = vst [vmem:[%s389 + $0x28] sm:$0xff] %v548
        %551 = vst [vmem:[%s396] sm:$0xff] %v537
        %552 = vst [vmem:[%s396 + $0x8] sm:$0xff] %v538
        %vm553 = vcmask 7168
        %554 = vst.msk [vmem:[%s412] sm:$0xff] %vm553, %v462
        %555 = vst.msk [vmem:[%s412 + $0x8] sm:$0xff] %vm553, %v477
        %s556 = sand.u32 %s177, 1
        %s557 = scalar_lea.sflag [#allocation5], %s556
        %s558 = sand.u32 %s177, 1
        %s559 = smul.addr %s558, 48
        %s560 = scalar_lea.vmem [#allocation9], %s559
        %s561 = sand.u32 %s203, 1
        %s562 = scalar_lea.sflag [#allocation11], %s561
        %s563 = sand.u32 %s203, 1
        %s564 = smul.addr %s563, 16
        %s565 = scalar_lea.vmem [#allocation10], %s564
        %s566 = smul.u32 2, %s33
        %p567 = scmp.lt.s32.totalorder %s566, 3
        %s568 = scalar_select %p567, %s566, 3
        %s569 = smul.addr %s568, 8
        %s570 = scalar_lea.vmem %s8, %s569
        // Predicated region
        $region57: #{_multimodal_attention_impl.1} parent=43 // pred_check
          %p571 = pneg %p187
        $region58: #{_multimodal_attention_impl.1} parent=43 // pred_check_branch
          %573 = sbr.rel (%p571) target = $region60
        $region59: #{_multimodal_attention_impl.1} parent=43 // pred_region
          %s574 = smul.u32 2, %s33
          %576 = vsyncadd %s557, 0
          %s577 = smul.addr %s574, 3
          %s578 = smul.addr %s577, 8
          %s579 = scalar_lea.hbm %s6, %s578
          %s580 = sshll.u32 %s560, 4
          %s581 = int_to_ptr.vmem [resolvable:$true] %s580
          %s582 = sshll.u32 %s579, 4
          %s583 = int_to_ptr.hbm [resolvable:$true] %s582
          %588 = dma.vmem_to_hbm [thread:$0]  %s581, 768, %s583, %s557, 384, 384, 24
        $region60: #{_multimodal_attention_impl.1} parent=43 // pred_fallthru
          _
        // Predicated region
        $region61: #{_multimodal_attention_impl.1} parent=43 // pred_check
          %p589 = pneg %p213
        $region62: #{_multimodal_attention_impl.1} parent=43 // pred_check_branch
          %591 = sbr.rel (%p589) target = $region64
        $region63: #{_multimodal_attention_impl.1} parent=43 // pred_region
          %s592 = smul.u32 2, %s33
          %594 = vsyncadd %s562, 0
          %s595 = smul.addr %s592, 8
          %s596 = scalar_lea.hbm %s7, %s595
          %s597 = sshll.u32 %s565, 4
          %s598 = int_to_ptr.vmem [resolvable:$true] %s597
          %s599 = sshll.u32 %s596, 4
          %s600 = int_to_ptr.hbm [resolvable:$true] %s599
          %605 = dma.vmem_to_hbm [thread:$0]  %s598, 256, %s600, %s562, 128, 128, 8
        $region64: #{_multimodal_attention_impl.1} parent=43 // pred_fallthru
          _
        // Predicated region
        $region65: #{_multimodal_attention_impl.1} parent=43 // pred_check
          %p606 = pneg %p239
        $region66: #{_multimodal_attention_impl.1} parent=43 // pred_check_branch
          %608 = sbr.rel (%p606) target = $region68
        $region67: #{_multimodal_attention_impl.1} parent=43 // pred_region
          %s609 = smul.u32 2, %s33
        $region68: #{_multimodal_attention_impl.1} parent=43 // pred_fallthru
          _
      $region44: #{_multimodal_attention_impl.1} parent=5 // pred_fallthru
        _
      %p610 = scmp.le.s32.totalorder 2, %s28
      // Predicated region
      $region69: #{_multimodal_attention_impl.1} parent=5 // pred_check
        %p611 = pneg %p610
      $region70: #{_multimodal_attention_impl.1} parent=5 // pred_check_branch
        %613 = sbr.rel (%p611) target = $region72
      $region71: #{_multimodal_attention_impl.1} parent=5 // pred_region
        %s614 = ssub.s32 %s28, 2
        // Predicated region
        $region73: #{_multimodal_attention_impl.1} parent=71 // pred_check
          %p615 = pneg %p193
        $region74: #{_multimodal_attention_impl.1} parent=71 // pred_check_branch
          %617 = sbr.rel (%p615) target = $region76
        $region75: #{_multimodal_attention_impl.1} parent=71 // pred_region
          %s618 = sand.u32 %s178, 1
          %s619 = scalar_lea.sflag [#allocation5], %s618
          %s620 = sand.u32 %s178, 1
          %s621 = smul.addr %s620, 48
          %s622 = scalar_lea.vmem [#allocation9], %s621
          %624 = dma.done %s619, 768
        $region76: #{_multimodal_attention_impl.1} parent=71 // pred_fallthru
          _
        // Predicated region
        $region77: #{_multimodal_attention_impl.1} parent=71 // pred_check
          %p625 = pneg %p219
        $region78: #{_multimodal_attention_impl.1} parent=71 // pred_check_branch
          %627 = sbr.rel (%p625) target = $region80
        $region79: #{_multimodal_attention_impl.1} parent=71 // pred_region
          %s628 = sand.u32 %s204, 1
          %s629 = scalar_lea.sflag [#allocation11], %s628
          %s630 = sand.u32 %s204, 1
          %s631 = smul.addr %s630, 16
          %s632 = scalar_lea.vmem [#allocation10], %s631
          %634 = dma.done %s629, 256
        $region80: #{_multimodal_attention_impl.1} parent=71 // pred_fallthru
          _
        // Predicated region
        $region81: #{_multimodal_attention_impl.1} parent=71 // pred_check
          %p635 = pneg %p245
        $region82: #{_multimodal_attention_impl.1} parent=71 // pred_check_branch
          %637 = sbr.rel (%p635) target = $region84
        $region83: #{_multimodal_attention_impl.1} parent=71 // pred_region
          %s638 = smul.u32 2, %s34
          %p639 = scmp.lt.s32.totalorder %s638, 3
          %s640 = scalar_select %p639, %s638, 3
          %s641 = smul.addr %s640, 8
          %s642 = scalar_lea.vmem %s8, %s641
        $region84: #{_multimodal_attention_impl.1} parent=71 // pred_fallthru
          _
      $region72: #{_multimodal_attention_impl.1} parent=5 // pred_fallthru
        _
    $region6: #{_multimodal_attention_impl.1} parent=1 // loop_footer
      %s32 = sadd.s32 1, %s28
    $region7: #{_multimodal_attention_impl.1} parent=1 // loop_footer_branch
      %27 = sbr.rel target = $region3
    $region8: #{_multimodal_attention_impl.1} parent=1 // loop_exit
      _
    %643 = vsyncpa [#allocation4], 1
    %s644 = scalar_lea.sflag [#allocation4], 1
    %645 = vsyncpa %s644, 1
    %646 = vsyncpa [#allocation7], 1
    %s647 = scalar_lea.sflag [#allocation7], 1
    %648 = vsyncpa %s647, 1
    %649 = vsyncpa [#allocation5], 1
    %s650 = scalar_lea.sflag [#allocation5], 1
    %651 = vsyncpa %s650, 1
    %652 = vsyncpa [#allocation11], 1
    %s653 = scalar_lea.sflag [#allocation11], 1
    %654 = vsyncpa %s653, 1

// kernel: _multimodal_attention_impl.1
$region0: #{_multimodal_attention_impl.1}
  #allocation0 [shape = 'u32[]', space=smem, size = 0x4, offset = 0x4, fixed_abs, tag = 'smem constant byte address 0x4 - core index']
  #allocation1 [shape = 'u32[72,128]{1,0:T(1,128)}', space=vmem, size = 0x9000, scoped, tag = 'internal scratch']
  #allocation2 [shape = 'f32[1]{0:T(128)S(6)}', space=smem, size = 0x200, scoped, tag = 'scoped memory for _multimodal_attention_impl.1']
  %s0 = inlined_call_operand.hbm [shape: f32[32,256], index: 0, kind: input, shape index: {}]
  %s1 = inlined_call_operand.hbm [shape: f32[32,128], index: 1, kind: input, shape index: {}]
  %s2 = inlined_call_operand.vmem [shape: f32[1,256], index: 2, kind: input, shape index: {}]
  %s3 = inlined_call_operand.<no memory space> [shape: f32[1], index: 3, kind: input, shape index: {}]
  %s4 = inlined_call_operand.hbm [shape: f32[128,128], index: 4, kind: input, shape index: {}]
  %s5 = inlined_call_operand.vmem [shape: f32[1,128], index: 5, kind: input, shape index: {}]
  %s6 = inlined_call_operand.hbm [shape: f32[32,384], index: 6, kind: output, shape index: {0}]
  %s7 = inlined_call_operand.hbm [shape: f32[32,128], index: 7, kind: output, shape index: {1}]
  %s8 = inlined_call_operand.vmem [shape: f32[32,1], index: 8, kind: output, shape index: {2}]
  %9 = xla_tuple %s6, %s7, %s8
  %s10 = sld [smem:[#allocation0]]
  $region85: #{_multimodal_attention_impl.1} parent=0
    _
  %s12 = ssub.s32 1, %s10
  %s13 = scalar_select 0, %s12, %s10
  %14 = sst [smem:[#allocation2]] %s3
  $region1: #{_multimodal_attention_impl.1} parent=0
    #allocation3 [shape = 'u8[32768]{0}', space=vmem, size = 0x8000, scoped, tag = 'input window, operand 0']
    #allocation4 [shape = 's32[2]{0}', space=sflag, size = 0x8, scoped, tag = 'scoped memory for _multimodal_attention_impl.1']
    #allocation5 [shape = 's32[2]{0}', space=sflag, size = 0x8, scoped, tag = 'scoped memory for _multimodal_attention_impl.1']
    #allocation6 [shape = 'u8[16384]{0}', space=vmem, size = 0x4000, scoped, tag = 'input window, operand 1']
    #allocation7 [shape = 's32[2]{0}', space=sflag, size = 0x8, scoped, tag = 'scoped memory for _multimodal_attention_impl.1']
    #allocation8 [shape = 'u8[65536]{0}', space=vmem, size = 0x10000, scoped, tag = 'input window, operand 4, single buffered']
    #allocation9 [shape = 'u8[49152]{0}', space=vmem, size = 0xc000, scoped, tag = 'output window, operand 0']
    #allocation10 [shape = 'u8[16384]{0}', space=vmem, size = 0x4000, scoped, tag = 'output window, operand 1']
    #allocation11 [shape = 's32[2]{0}', space=sflag, size = 0x8, scoped, tag = 'scoped memory for _multimodal_attention_impl.1']
    %15 = vsyncpa [#allocation4], 0
    %s16 = scalar_lea.sflag [#allocation4], 1
    %17 = vsyncpa %s16, 0
    %18 = vsyncpa [#allocation7], 0
    %s19 = scalar_lea.sflag [#allocation7], 1
    %20 = vsyncpa %s19, 0
    %21 = vsyncpa [#allocation5], 0
    %s22 = scalar_lea.sflag [#allocation5], 1
    %23 = vsyncpa %s22, 0
    %24 = vsyncpa [#allocation11], 0
    %s25 = scalar_lea.sflag [#allocation11], 1
    %26 = vsyncpa %s25, 0
    loop: start=0, step=1, limit=4
    $region2: #{_multimodal_attention_impl.1} parent=1 // loop_pre_header
      _
    $region3: #{_multimodal_attention_impl.1} parent=1 // loop_header
      %s28 = sphi 0, %s32
      %p29 = scmp.ge.s32.totalorder %s28, 4
      %s38 = sphi 0, %s40
      %s41 = sphi 0, %s38
      %s42 = sphi 0, %s41
      %s58 = sphi 0, %s42
      %s64 = sphi 0, %s66
      %s67 = sphi 0, %s64
      %s68 = sphi 0, %s67
      %s84 = sphi 0, %s68
      %s88 = sphi 0, %s88
      %s90 = sphi 0, %s88
      %s91 = sphi 0, %s90
      %s105 = sphi 0, %s91
      %s109 = sphi 0, %s109
      %s111 = sphi 0, %s109
      %s112 = sphi 0, %s111
      %s126 = sphi 0, %s112
      %s130 = sphi 0, %s130
      %s132 = sphi 0, %s130
      %s133 = sphi 0, %s132
      %s147 = sphi 0, %s133
      %s151 = sphi 0, %s151
      %s153 = sphi 0, %s151
      %s154 = sphi 0, %s153
      %s168 = sphi 0, %s154
      %s174 = sphi 0, %s176
      %s177 = sphi 0, %s174
      %s178 = sphi 0, %s177
      %s194 = sphi 0, %s178
      %s200 = sphi 0, %s202
      %s203 = sphi 0, %s200
      %s204 = sphi 0, %s203
      %s220 = sphi 0, %s204
      %s226 = sphi 0, %s228
      %s229 = sphi 0, %s226
      %s230 = sphi 0, %s229
      %s246 = sphi 0, %s230
    $region4: #{_multimodal_attention_impl.1} parent=1 // loop_header_branch
      %31 = sbr.rel (%p29) target = $region8
    $region5: #{_multimodal_attention_impl.1} parent=1 // loop_body
      %s33 = ssub.s32 %s28, 1
      %s34 = ssub.s32 %s28, 2
      %s35 = sadd.s32 %s28, 1
      %s36 = ssub.s32 %s28, %s35
      %p37 = scmp.eq.s32.totalorder %s36, 0
      %s39 = sadd.s32 %s38, 1
      %s40 = scalar_select %p37, %s38, %s39
      %p43 = pneg %p37
      %p44 = scmp.eq.s32.totalorder %s28, 1
      %p45 = por %p43, %p44
      %p46 = scmp.ne.s32.totalorder %s38, %s41
      %p47 = scmp.eq.s32.totalorder %s28, 0
      %p48 = por %p46, %p47
      %p49 = scmp.ne.s32.totalorder %s38, %s41
      %p50 = scmp.eq.s32.totalorder %s33, 1
      %p51 = por %p49, %p50
      %p52 = scmp.ne.s32.totalorder %s41, %s42
      %p53 = scmp.eq.s32.totalorder %s33, 0
      %p54 = por %p52, %p53
      %p55 = scmp.ne.s32.totalorder %s41, %s42
      %p56 = scmp.eq.s32.totalorder %s34, 1
      %p57 = por %p55, %p56
      %p59 = scmp.ne.s32.totalorder %s42, %s58
      %p60 = scmp.eq.s32.totalorder %s34, 0
      %p61 = por %p59, %p60
      %s62 = ssub.s32 %s28, %s35
      %p63 = scmp.eq.s32.totalorder %s62, 0
      %s65 = sadd.s32 %s64, 1
      %s66 = scalar_select %p63, %s64, %s65
      %p69 = pneg %p63
      %p70 = scmp.eq.s32.totalorder %s28, 1
      %p71 = por %p69, %p70
      %p72 = scmp.ne.s32.totalorder %s64, %s67
      %p73 = scmp.eq.s32.totalorder %s28, 0
      %p74 = por %p72, %p73
      %p75 = scmp.ne.s32.totalorder %s64, %s67
      %p76 = scmp.eq.s32.totalorder %s33, 1
      %p77 = por %p75, %p76
      %p78 = scmp.ne.s32.totalorder %s67, %s68
      %p79 = scmp.eq.s32.totalorder %s33, 0
      %p80 = por %p78, %p79
      %p81 = scmp.ne.s32.totalorder %s67, %s68
      %p82 = scmp.eq.s32.totalorder %s34, 1
      %p83 = por %p81, %p82
      %p85 = scmp.ne.s32.totalorder %s68, %s84
      %p86 = scmp.eq.s32.totalorder %s34, 0
      %p87 = por %p85, %p86
      %s89 = sadd.s32 %s88, 1
      %p92 = scmp.eq.s32.totalorder %s28, 1
      %p93 = scmp.ne.s32.totalorder %s88, %s90
      %p94 = scmp.eq.s32.totalorder %s28, 0
      %p95 = por %p93, %p94
      %p96 = scmp.ne.s32.totalorder %s88, %s90
      %p97 = scmp.eq.s32.totalorder %s33, 1
      %p98 = por %p96, %p97
      %p99 = scmp.ne.s32.totalorder %s90, %s91
      %p100 = scmp.eq.s32.totalorder %s33, 0
      %p101 = por %p99, %p100
      %p102 = scmp.ne.s32.totalorder %s90, %s91
      %p103 = scmp.eq.s32.totalorder %s34, 1
      %p104 = por %p102, %p103
      %p106 = scmp.ne.s32.totalorder %s91, %s105
      %p107 = scmp.eq.s32.totalorder %s34, 0
      %p108 = por %p106, %p107
      %s110 = sadd.s32 %s109, 1
      %p113 = scmp.eq.s32.totalorder %s28, 1
      %p114 = scmp.ne.s32.totalorder %s109, %s111
      %p115 = scmp.eq.s32.totalorder %s28, 0
      %p116 = por %p114, %p115
      %p117 = scmp.ne.s32.totalorder %s109, %s111
      %p118 = scmp.eq.s32.totalorder %s33, 1
      %p119 = por %p117, %p118
      %p120 = scmp.ne.s32.totalorder %s111, %s112
      %p121 = scmp.eq.s32.totalorder %s33, 0
      %p122 = por %p120, %p121
      %p123 = scmp.ne.s32.totalorder %s111, %s112
      %p124 = scmp.eq.s32.totalorder %s34, 1
      %p125 = por %p123, %p124
      %p127 = scmp.ne.s32.totalorder %s112, %s126
      %p128 = scmp.eq.s32.totalorder %s34, 0
      %p129 = por %p127, %p128
      %s131 = sadd.s32 %s130, 1
      %p134 = scmp.eq.s32.totalorder %s28, 1
      %p135 = scmp.ne.s32.totalorder %s130, %s132
      %p136 = scmp.eq.s32.totalorder %s28, 0
      %p137 = por %p135, %p136
      %p138 = scmp.ne.s32.totalorder %s130, %s132
      %p139 = scmp.eq.s32.totalorder %s33, 1
      %p140 = por %p138, %p139
      %p141 = scmp.ne.s32.totalorder %s132, %s133
      %p142 = scmp.eq.s32.totalorder %s33, 0
      %p143 = por %p141, %p142
      %p144 = scmp.ne.s32.totalorder %s132, %s133
      %p145 = scmp.eq.s32.totalorder %s34, 1
      %p146 = por %p144, %p145
      %p148 = scmp.ne.s32.totalorder %s133, %s147
      %p149 = scmp.eq.s32.totalorder %s34, 0
      %p150 = por %p148, %p149
      %s152 = sadd.s32 %s151, 1
      %p155 = scmp.eq.s32.totalorder %s28, 1
      %p156 = scmp.ne.s32.totalorder %s151, %s153
      %p157 = scmp.eq.s32.totalorder %s28, 0
      %p158 = por %p156, %p157
      %p159 = scmp.ne.s32.totalorder %s151, %s153
      %p160 = scmp.eq.s32.totalorder %s33, 1
      %p161 = por %p159, %p160
      %p162 = scmp.ne.s32.totalorder %s153, %s154
      %p163 = scmp.eq.s32.totalorder %s33, 0
      %p164 = por %p162, %p163
      %p165 = scmp.ne.s32.totalorder %s153, %s154
      %p166 = scmp.eq.s32.totalorder %s34, 1
      %p167 = por %p165, %p166
      %p169 = scmp.ne.s32.totalorder %s154, %s168
      %p170 = scmp.eq.s32.totalorder %s34, 0
      %p171 = por %p169, %p170
      %s172 = ssub.s32 %s28, %s35
      %p173 = scmp.eq.s32.totalorder %s172, 0
      %s175 = sadd.s32 %s174, 1
      %s176 = scalar_select %p173, %s174, %s175
      %p179 = pneg %p173
      %p180 = scmp.eq.s32.totalorder %s28, 1
      %p181 = por %p179, %p180
      %p182 = scmp.ne.s32.totalorder %s174, %s177
      %p183 = scmp.eq.s32.totalorder %s28, 0
      %p184 = por %p182, %p183
      %p185 = scmp.ne.s32.totalorder %s174, %s177
      %p186 = scmp.eq.s32.totalorder %s33, 1
      %p187 = por %p185, %p186
      %p188 = scmp.ne.s32.totalorder %s177, %s178
      %p189 = scmp.eq.s32.totalorder %s33, 0
      %p190 = por %p188, %p189
      %p191 = scmp.ne.s32.totalorder %s177, %s178
      %p192 = scmp.eq.s32.totalorder %s34, 1
      %p193 = por %p191, %p192
      %p195 = scmp.ne.s32.totalorder %s178, %s194
      %p196 = scmp.eq.s32.totalorder %s34, 0
      %p197 = por %p195, %p196
      %s198 = ssub.s32 %s28, %s35
      %p199 = scmp.eq.s32.totalorder %s198, 0
      %s201 = sadd.s32 %s200, 1
      %s202 = scalar_select %p199, %s200, %s201
      %p205 = pneg %p199
      %p206 = scmp.eq.s32.totalorder %s28, 1
      %p207 = por %p205, %p206
      %p208 = scmp.ne.s32.totalorder %s200, %s203
      %p209 = scmp.eq.s32.totalorder %s28, 0
      %p210 = por %p208, %p209
      %p211 = scmp.ne.s32.totalorder %s200, %s203
      %p212 = scmp.eq.s32.totalorder %s33, 1
      %p213 = por %p211, %p212
      %p214 = scmp.ne.s32.totalorder %s203, %s204
      %p215 = scmp.eq.s32.totalorder %s33, 0
      %p216 = por %p214, %p215
      %p217 = scmp.ne.s32.totalorder %s203, %s204
      %p218 = scmp.eq.s32.totalorder %s34, 1
      %p219 = por %p217, %p218
      %p221 = scmp.ne.s32.totalorder %s204, %s220
      %p222 = scmp.eq.s32.totalorder %s34, 0
      %p223 = por %p221, %p222
      %s224 = ssub.s32 %s28, %s35
      %p225 = scmp.eq.s32.totalorder %s224, 0
      %s227 = sadd.s32 %s226, 1
      %s228 = scalar_select %p225, %s226, %s227
      %p231 = pneg %p225
      %p232 = scmp.eq.s32.totalorder %s28, 1
      %p233 = por %p231, %p232
      %p234 = scmp.ne.s32.totalorder %s226, %s229
      %p235 = scmp.eq.s32.totalorder %s28, 0
      %p236 = por %p234, %p235
      %p237 = scmp.ne.s32.totalorder %s226, %s229
      %p238 = scmp.eq.s32.totalorder %s33, 1
      %p239 = por %p237, %p238
      %p240 = scmp.ne.s32.totalorder %s229, %s230
      %p241 = scmp.eq.s32.totalorder %s33, 0
      %p242 = por %p240, %p241
      %p243 = scmp.ne.s32.totalorder %s229, %s230
      %p244 = scmp.eq.s32.totalorder %s34, 1
      %p245 = por %p243, %p244
      %p247 = scmp.ne.s32.totalorder %s230, %s246
      %p248 = scmp.eq.s32.totalorder %s34, 0
      %p249 = por %p247, %p248
      %p250 = scmp.le.s32.totalorder 1, %s28
      %p251 = scmp.lt.s32.totalorder %s28, 3
      %p252 = pnand %p250, %p251
      %p253 = pneg %p252
      // Predicated region
      $region9: #{_multimodal_attention_impl.1} parent=5 // pred_check
        _
      $region10: #{_multimodal_attention_impl.1} parent=5 // pred_check_branch
        %255 = sbr.rel (%p252) target = $region12
      $region11: #{_multimodal_attention_impl.1} parent=5 // pred_region
        %s256 = ssub.s32 %s28, 1
        // Predicated region
        $region13: #{_multimodal_attention_impl.1} parent=11 // pred_check
          %p257 = pneg %p101
        $region14: #{_multimodal_attention_impl.1} parent=11 // pred_check_branch
          %259 = sbr.rel (%p257) target = $region16
        $region15: #{_multimodal_attention_impl.1} parent=11 // pred_region
          _
        $region16: #{_multimodal_attention_impl.1} parent=11 // pred_fallthru
          _
        // Predicated region
        $region17: #{_multimodal_attention_impl.1} parent=11 // pred_check
          %p260 = pneg %p122
        $region18: #{_multimodal_attention_impl.1} parent=11 // pred_check_branch
          %262 = sbr.rel (%p260) target = $region20
        $region19: #{_multimodal_attention_impl.1} parent=11 // pred_region
          _
        $region20: #{_multimodal_attention_impl.1} parent=11 // pred_fallthru
          _
        // Predicated region
        $region21: #{_multimodal_attention_impl.1} parent=11 // pred_check
          %p263 = pneg %p143
        $region22: #{_multimodal_attention_impl.1} parent=11 // pred_check_branch
          %265 = sbr.rel (%p263) target = $region24
        $region23: #{_multimodal_attention_impl.1} parent=11 // pred_region
          %267 = vsyncadd [#allocation7], 0
          %s268 = sshll.u32 %s4, 4
          %s269 = int_to_ptr.hbm [resolvable:$true] %s268
          %s270 = sshll.u32 [#allocation8], 4
          %s271 = int_to_ptr.vmem [resolvable:$true] %s270
          %276 = dma.hbm_to_vmem [thread:$0]  %s269, 2048, %s271, [#allocation7], 128, 128, 8
        $region24: #{_multimodal_attention_impl.1} parent=11 // pred_fallthru
          _
        // Predicated region
        $region25: #{_multimodal_attention_impl.1} parent=11 // pred_check
          %p277 = pneg %p164
        $region26: #{_multimodal_attention_impl.1} parent=11 // pred_check_branch
          %279 = sbr.rel (%p277) target = $region28
        $region27: #{_multimodal_attention_impl.1} parent=11 // pred_region
          _
        $region28: #{_multimodal_attention_impl.1} parent=11 // pred_fallthru
          _
      $region12: #{_multimodal_attention_impl.1} parent=5 // pred_fallthru
        _
      %p280 = scmp.lt.s32.totalorder %s28, 2
      // Predicated region
      $region29: #{_multimodal_attention_impl.1} parent=5 // pred_check
        %p281 = pneg %p280
      $region30: #{_multimodal_attention_impl.1} parent=5 // pred_check_branch
        %283 = sbr.rel (%p281) target = $region32
      $region31: #{_multimodal_attention_impl.1} parent=5 // pred_region
        // Predicated region
        $region33: #{_multimodal_attention_impl.1} parent=31 // pred_check
          %p284 = pneg %p48
        $region34: #{_multimodal_attention_impl.1} parent=31 // pred_check_branch
          %286 = sbr.rel (%p284) target = $region36
        $region35: #{_multimodal_attention_impl.1} parent=31 // pred_region
          %s287 = sand.u32 %s38, 1
          %s288 = scalar_lea.sflag [#allocation4], %s287
          %s289 = sand.u32 %s38, 1
          %s290 = smul.addr %s289, 32
          %s291 = scalar_lea.vmem [#allocation3], %s290
          %s292 = smul.u32 2, %s28
          %294 = vsyncadd %s288, 0
          %s295 = smul.addr %s292, 2
          %s296 = smul.addr %s295, 8
          %s297 = scalar_lea.hbm %s0, %s296
          %s298 = sshll.u32 %s297, 4
          %s299 = int_to_ptr.hbm [resolvable:$true] %s298
          %s300 = sshll.u32 %s291, 4
          %s301 = int_to_ptr.vmem [resolvable:$true] %s300
          %306 = dma.hbm_to_vmem [thread:$0]  %s299, 512, %s301, %s288, 256, 256, 16
        $region36: #{_multimodal_attention_impl.1} parent=31 // pred_fallthru
          _
        // Predicated region
        $region37: #{_multimodal_attention_impl.1} parent=31 // pred_check
          %p307 = pneg %p74
        $region38: #{_multimodal_attention_impl.1} parent=31 // pred_check_branch
          %309 = sbr.rel (%p307) target = $region40
        $region39: #{_multimodal_attention_impl.1} parent=31 // pred_region
          %s310 = sand.u32 %s28, 1
          %s311 = scalar_lea.sflag [#allocation7], %s310
          %s312 = sand.u32 %s64, 1
          %s313 = smul.addr %s312, 16
          %s314 = scalar_lea.vmem [#allocation6], %s313
          %s315 = smul.u32 2, %s28
          %317 = vsyncadd %s311, 0
          %s318 = smul.addr %s315, 8
          %s319 = scalar_lea.hbm %s1, %s318
          %s320 = sshll.u32 %s319, 4
          %s321 = int_to_ptr.hbm [resolvable:$true] %s320
          %s322 = sshll.u32 %s314, 4
          %s323 = int_to_ptr.vmem [resolvable:$true] %s322
          %328 = dma.hbm_to_vmem [thread:$0]  %s321, 256, %s323, %s311, 128, 128, 8
        $region40: #{_multimodal_attention_impl.1} parent=31 // pred_fallthru
          _
      $region32: #{_multimodal_attention_impl.1} parent=5 // pred_fallthru
        _
      %p329 = scmp.le.s32.totalorder 1, %s28
      %p330 = scmp.lt.s32.totalorder %s28, 3
      %p331 = pnand %p329, %p330
      %p332 = pneg %p331
      // Predicated region
      $region41: #{_multimodal_attention_impl.1} parent=5 // pred_check
        _
      $region42: #{_multimodal_attention_impl.1} parent=5 // pred_check_branch
        %334 = sbr.rel (%p331) target = $region44
      $region43: #{_multimodal_attention_impl.1} parent=5 // pred_region
        %s335 = ssub.s32 %s28, 1
        %s336 = sand.u32 %s41, 1
        %s337 = scalar_lea.sflag [#allocation4], %s336
        %s338 = sand.u32 %s41, 1
        %s339 = smul.addr %s338, 32
        %s340 = scalar_lea.vmem [#allocation3], %s339
        // Predicated region
        $region45: #{_multimodal_attention_impl.1} parent=43 // pred_check
          %p341 = pneg %p54
        $region46: #{_multimodal_attention_impl.1} parent=43 // pred_check_branch
          %343 = sbr.rel (%p341) target = $region48
        $region47: #{_multimodal_attention_impl.1} parent=43 // pred_region
          %345 = dma.done %s337, 512
        $region48: #{_multimodal_attention_impl.1} parent=43 // pred_fallthru
          _
        %s346 = sand.u32 %s33, 1
        %s347 = scalar_lea.sflag [#allocation7], %s346
        %s348 = sand.u32 %s67, 1
        %s349 = smul.addr %s348, 16
        %s350 = scalar_lea.vmem [#allocation6], %s349
        // Predicated region
        $region49: #{_multimodal_attention_impl.1} parent=43 // pred_check
          %p351 = pneg %p80
        $region50: #{_multimodal_attention_impl.1} parent=43 // pred_check_branch
          %353 = sbr.rel (%p351) target = $region52
        $region51: #{_multimodal_attention_impl.1} parent=43 // pred_region
          %355 = dma.done %s347, 256
        $region52: #{_multimodal_attention_impl.1} parent=43 // pred_fallthru
          _
        // Predicated region
        $region53: #{_multimodal_attention_impl.1} parent=43 // pred_check
          %p356 = pneg %p143
        $region54: #{_multimodal_attention_impl.1} parent=43 // pred_check_branch
          %358 = sbr.rel (%p356) target = $region56
        $region55: #{_multimodal_attention_impl.1} parent=43 // pred_region
          %360 = dma.done [#allocation7], 2048
        $region56: #{_multimodal_attention_impl.1} parent=43 // pred_fallthru
          _
        %s361 = sand.u32 %s41, 1
        %s362 = scalar_lea.sflag [#allocation4], %s361
        %s363 = sand.u32 %s41, 1
        %s364 = smul.addr %s363, 32
        %s365 = scalar_lea.vmem [#allocation3], %s364
        %p366 = pneg %p54
        %p367 = pneg %p51
        %s368 = sand.u32 %s33, 1
        %s369 = scalar_lea.sflag [#allocation7], %s368
        %s370 = sand.u32 %s67, 1
        %s371 = smul.addr %s370, 16
        %s372 = scalar_lea.vmem [#allocation6], %s371
        %p373 = pneg %p80
        %p374 = pneg %p77
        %p375 = pneg %p101
        %p376 = pneg %p98
        %p377 = pneg %p122
        %p378 = pneg %p119
        %p379 = pneg %p143
        %p380 = pneg %p140
        %p381 = pneg %p164
        %p382 = pneg %p161
        %p383 = pneg %p190
        %p384 = pneg %p187
        %s385 = sand.u32 %s177, 1
        %s386 = scalar_lea.sflag [#allocation5], %s385
        %s387 = sand.u32 %s177, 1
        %s388 = smul.addr %s387, 48
        %s389 = scalar_lea.vmem [#allocation9], %s388
        %p390 = pneg %p216
        %p391 = pneg %p213
        %s392 = sand.u32 %s203, 1
        %s393 = scalar_lea.sflag [#allocation11], %s392
        %s394 = sand.u32 %s203, 1
        %s395 = smul.addr %s394, 16
        %s396 = scalar_lea.vmem [#allocation10], %s395
        %p397 = pneg %p242
        %p398 = pneg %p239
        %s399 = smul.u32 2, %s33
        %p400 = scmp.lt.s32.totalorder %s399, 3
        %s401 = scalar_select %p400, %s399, 3
        %s402 = smul.addr %s401, 8
        %s403 = scalar_lea.vmem %s8, %s402
        %s404 = smul.u32 2, %s33
        %s405 = smul.u32 2, %s33
        %s406 = smul.u32 2, %s33
        %s407 = smul.u32 2, %s33
        %s408 = smul.u32 2, %s33
        %p409 = scmp.lt.s32.totalorder %s408, 3
        %s410 = scalar_select %p409, %s408, 3
        %s411 = smul.addr %s410, 8
        %s412 = scalar_lea.vmem %s8, %s411
        %s413 = smul.u32 2, %s33
        %v414 = vld [vmem:[%s340] sm:$0xff]
        %v415 = vld [vmem:[%s340 + $0x8] sm:$0xff]
        %v416 = vld [vmem:[%s340 + $0x10] sm:$0xff]
        %v417 = vld [vmem:[%s340 + $0x18] sm:$0xff]
        %v418 = vld [vmem:[%s350] sm:$0xff]
        %v419 = vld [vmem:[%s350 + $0x8] sm:$0xff]
        %v420 = vld [vmem:[%s2] sm:$0x3]
        %v422 = vperm.slane %v420, 0
        %v423 = vperm.slane %v420, 1
        %v426 = vmul.f32 %v414, %v422
        %v427 = vmul.f32 %v415, %v423
        %v428 = vmul.f32 %v416, %v422
        %v429 = vmul.f32 %v417, %v423
        %v430 = vadd.f32 %v426, %v427
        %431 = vadd.xlane.f32.xlu0 %v430
        %v432 = vpop.xlane.xlu0 %431
        %v433 = vadd.f32 %v428, %v429
        %434 = vadd.xlane.f32.xlu0 %v433
        %v435 = vpop.xlane.xlu0 %434
        %s436 = sld [smem:[#allocation2]]
        %v437 = vstv %s436
        %v438 = vadd.f32 %v432, %v437
        %v439 = vadd.f32 %v435, %v437
        %v440 = vxor.u32 %v438, 2147483648
        %v441 = vxor.u32 %v439, 2147483648
        %v442 = vmul.f32 %v440, 1.442695
        %v443 = vpow.pop %v442
        %v444 = vmul.f32 %v441, 1.442695
        %v445 = vpow.pop %v444
        %v446 = vadd.f32 %v443, 1.0
        %v447 = vadd.f32 %v445, 1.0
        %v448 = vrcp.pop %v446
        %v449 = vmul.f32 %v446, %v448
        %v450 = vsub.f32 1.0, %v449
        %v451 = vmul.f32 %v448, %v450
        %v452 = vadd.f32 %v448, %v451
        %vm453 = vweird.f32 %v446
        %vm454 = vweird.f32 %v448
        %vm455 = vmor %vm453, %vm454
        %v456 = vsel %vm455, %v448, %v452
        %v457 = vand.u32 2147483647, %v446
        %vm458 = vcmp.eq.f32.partialorder %v457, 8.507059e+37
        %v459 = vand.u32 %v446, 2147483648
        %v460 = vor.u32 1.1754944e-38, %v459
        %v461 = vsel %vm458, %v460, %v456
        %v462 = vmul.f32 1.0, %v461
        %v463 = vrcp.pop %v447
        %v464 = vmul.f32 %v447, %v463
        %v465 = vsub.f32 1.0, %v464
        %v466 = vmul.f32 %v463, %v465
        %v467 = vadd.f32 %v463, %v466
        %vm468 = vweird.f32 %v447
        %vm469 = vweird.f32 %v463
        %vm470 = vmor %vm468, %vm469
        %v471 = vsel %vm470, %v463, %v467
        %v472 = vand.u32 2147483647, %v447
        %vm473 = vcmp.eq.f32.partialorder %v472, 8.507059e+37
        %v474 = vand.u32 %v447, 2147483648
        %v475 = vor.u32 1.1754944e-38, %v474
        %v476 = vsel %vm473, %v475, %v471
        %v477 = vmul.f32 1.0, %v476
        %v478 = vld [vmem:[#allocation8] sm:$0xff]
        %v479 = vld [vmem:[#allocation8 + $0x8] sm:$0xff]
        %v480 = vld [vmem:[#allocation8 + $0x10] sm:$0xff]
        %v481 = vld [vmem:[#allocation8 + $0x18] sm:$0xff]
        %v482 = vld [vmem:[#allocation8 + $0x20] sm:$0xff]
        %v483 = vld [vmem:[#allocation8 + $0x28] sm:$0xff]
        %v484 = vld [vmem:[#allocation8 + $0x30] sm:$0xff]
        %v485 = vld [vmem:[#allocation8 + $0x38] sm:$0xff]
        %v486 = vld [vmem:[#allocation8 + $0x40] sm:$0xff]
        %v487 = vld [vmem:[#allocation8 + $0x48] sm:$0xff]
        %v488 = vld [vmem:[#allocation8 + $0x50] sm:$0xff]
        %v489 = vld [vmem:[#allocation8 + $0x58] sm:$0xff]
        %v490 = vld [vmem:[#allocation8 + $0x60] sm:$0xff]
        %v491 = vld [vmem:[#allocation8 + $0x68] sm:$0xff]
        %v492 = vld [vmem:[#allocation8 + $0x70] sm:$0xff]
        %v493 = vld [vmem:[#allocation8 + $0x78] sm:$0xff]
        %v494 = vld [vmem:[%s5] sm:$0x1]
        %v496 = vperm.slane %v494, 0
        %498 = vmatpush.msra.mxu0 %v493
        %499 = vmatpush.msra.mxu0 %v492
        %500 = vmatpush.msra.mxu0 %v491
        %501 = vmatpush.msra.mxu0 %v490
        %502 = vmatpush.msra.mxu0 %v489
        %503 = vmatpush.msra.mxu0 %v488
        %504 = vmatpush.msra.mxu0 %v487
        %505 = vmatpush.msra.mxu0 %v486
        %506 = vmatpush.msra.mxu0 %v485
        %507 = vmatpush.msra.mxu0 %v484
        %508 = vmatpush.msra.mxu0 %v483
        %509 = vmatpush.msra.mxu0 %v482
        %510 = vmatpush.msra.mxu0 %v481
        %511 = vmatpush.msra.mxu0 %v480
        %512 = vmatpush.msra.mxu0 %v479
        %513 = vmatpush.msra.mxu0 %v478
        %514 = vmatmul.f32.gmra.mxu0 %v418
        %v515 = vpop.f32.mrf.mxu0
        %v516 = vadd.f32 %v496, %v515
        %517 = vmatmul.f32.gmra.mxu0 %v419
        %v518 = vpop.f32.mrf.mxu0
        %v519 = vadd.f32 %v496, %v518
        %520 = vdwg.mxu0
        %521 = vmax.xlane.f32.xlu0 %v516
        %v522 = vpop.xlane.xlu0 %521
        %523 = vmax.xlane.f32.xlu0 %v519
        %v524 = vpop.xlane.xlu0 %523
        %v525 = vsub.f32 %v516, %v522
        %v526 = vsub.f32 %v519, %v524
        %v527 = vmul.f32 %v525, 1.442695
        %v528 = vpow.pop %v527
        %v529 = vmul.f32 %v526, 1.442695
        %v530 = vpow.pop %v529
        %531 = vadd.xlane.f32.xlu0 %v528
        %v532 = vpop.xlane.xlu0 %531
        %533 = vadd.xlane.f32.xlu0 %v530
        %v534 = vpop.xlane.xlu0 %533
        %v535 = vrcp.pop %v532
        %v536 = vrcp.pop %v534
        %v537 = vmul.f32 %v528, %v535
        %v538 = vmul.f32 %v530, %v536
        %v539 = vmul.f32 %v462, %v414
        %v540 = vmul.f32 %v462, %v415
        %v541 = vmul.f32 %v477, %v416
        %v542 = vmul.f32 %v477, %v417
        %543 = vst [vmem:[%s389] sm:$0xff] %v539
        %544 = vst [vmem:[%s389 + $0x8] sm:$0xff] %v540
        %545 = vst [vmem:[%s389 + $0x18] sm:$0xff] %v541
        %546 = vst [vmem:[%s389 + $0x20] sm:$0xff] %v542
        %v547 = vmul.f32 %v537, %v418
        %v548 = vmul.f32 %v538, %v419
        %549 = vst [vmem:[%s389 + $0x10] sm:$0xff] %v547
        %550 = vst [vmem:[%s389 + $0x28] sm:$0xff] %v548
        %551 = vst [vmem:[%s396] sm:$0xff] %v537
        %552 = vst [vmem:[%s396 + $0x8] sm:$0xff] %v538
        %vm553 = vcmask 7168
        %554 = vst.msk [vmem:[%s412] sm:$0xff] %vm553, %v462
        %555 = vst.msk [vmem:[%s412 + $0x8] sm:$0xff] %vm553, %v477
        %s556 = sand.u32 %s177, 1
        %s557 = scalar_lea.sflag [#allocation5], %s556
        %s558 = sand.u32 %s177, 1
        %s559 = smul.addr %s558, 48
        %s560 = scalar_lea.vmem [#allocation9], %s559
        %s561 = sand.u32 %s203, 1
        %s562 = scalar_lea.sflag [#allocation11], %s561
        %s563 = sand.u32 %s203, 1
        %s564 = smul.addr %s563, 16
        %s565 = scalar_lea.vmem [#allocation10], %s564
        %s566 = smul.u32 2, %s33
        %p567 = scmp.lt.s32.totalorder %s566, 3
        %s568 = scalar_select %p567, %s566, 3
        %s569 = smul.addr %s568, 8
        %s570 = scalar_lea.vmem %s8, %s569
        // Predicated region
        $region57: #{_multimodal_attention_impl.1} parent=43 // pred_check
          %p571 = pneg %p187
        $region58: #{_multimodal_attention_impl.1} parent=43 // pred_check_branch
          %573 = sbr.rel (%p571) target = $region60
        $region59: #{_multimodal_attention_impl.1} parent=43 // pred_region
          %s574 = smul.u32 2, %s33
          %576 = vsyncadd %s557, 0
          %s577 = smul.addr %s574, 3
          %s578 = smul.addr %s577, 8
          %s579 = scalar_lea.hbm %s6, %s578
          %s580 = sshll.u32 %s560, 4
          %s581 = int_to_ptr.vmem [resolvable:$true] %s580
          %s582 = sshll.u32 %s579, 4
          %s583 = int_to_ptr.hbm [resolvable:$true] %s582
          %588 = dma.vmem_to_hbm [thread:$0]  %s581, 768, %s583, %s557, 384, 384, 24
        $region60: #{_multimodal_attention_impl.1} parent=43 // pred_fallthru
          _
        // Predicated region
        $region61: #{_multimodal_attention_impl.1} parent=43 // pred_check
          %p589 = pneg %p213
        $region62: #{_multimodal_attention_impl.1} parent=43 // pred_check_branch
          %591 = sbr.rel (%p589) target = $region64
        $region63: #{_multimodal_attention_impl.1} parent=43 // pred_region
          %s592 = smul.u32 2, %s33
          %594 = vsyncadd %s562, 0
          %s595 = smul.addr %s592, 8
          %s596 = scalar_lea.hbm %s7, %s595
          %s597 = sshll.u32 %s565, 4
          %s598 = int_to_ptr.vmem [resolvable:$true] %s597
          %s599 = sshll.u32 %s596, 4
          %s600 = int_to_ptr.hbm [resolvable:$true] %s599
          %605 = dma.vmem_to_hbm [thread:$0]  %s598, 256, %s600, %s562, 128, 128, 8
        $region64: #{_multimodal_attention_impl.1} parent=43 // pred_fallthru
          _
        // Predicated region
        $region65: #{_multimodal_attention_impl.1} parent=43 // pred_check
          %p606 = pneg %p239
        $region66: #{_multimodal_attention_impl.1} parent=43 // pred_check_branch
          %608 = sbr.rel (%p606) target = $region68
        $region67: #{_multimodal_attention_impl.1} parent=43 // pred_region
          %s609 = smul.u32 2, %s33
        $region68: #{_multimodal_attention_impl.1} parent=43 // pred_fallthru
          _
      $region44: #{_multimodal_attention_impl.1} parent=5 // pred_fallthru
        _
      %p610 = scmp.le.s32.totalorder 2, %s28
      // Predicated region
      $region69: #{_multimodal_attention_impl.1} parent=5 // pred_check
        %p611 = pneg %p610
      $region70: #{_multimodal_attention_impl.1} parent=5 // pred_check_branch
        %613 = sbr.rel (%p611) target = $region72
      $region71: #{_multimodal_attention_impl.1} parent=5 // pred_region
        %s614 = ssub.s32 %s28, 2
        // Predicated region
        $region73: #{_multimodal_attention_impl.1} parent=71 // pred_check
          %p615 = pneg %p193
        $region74: #{_multimodal_attention_impl.1} parent=71 // pred_check_branch
          %617 = sbr.rel (%p615) target = $region76
        $region75: #{_multimodal_attention_impl.1} parent=71 // pred_region
          %s618 = sand.u32 %s178, 1
          %s619 = scalar_lea.sflag [#allocation5], %s618
          %s620 = sand.u32 %s178, 1
          %s621 = smul.addr %s620, 48
          %s622 = scalar_lea.vmem [#allocation9], %s621
          %624 = dma.done %s619, 768
        $region76: #{_multimodal_attention_impl.1} parent=71 // pred_fallthru
          _
        // Predicated region
        $region77: #{_multimodal_attention_impl.1} parent=71 // pred_check
          %p625 = pneg %p219
        $region78: #{_multimodal_attention_impl.1} parent=71 // pred_check_branch
          %627 = sbr.rel (%p625) target = $region80
        $region79: #{_multimodal_attention_impl.1} parent=71 // pred_region
          %s628 = sand.u32 %s204, 1
          %s629 = scalar_lea.sflag [#allocation11], %s628
          %s630 = sand.u32 %s204, 1
          %s631 = smul.addr %s630, 16
          %s632 = scalar_lea.vmem [#allocation10], %s631
          %634 = dma.done %s629, 256
        $region80: #{_multimodal_attention_impl.1} parent=71 // pred_fallthru
          _
        // Predicated region
        $region81: #{_multimodal_attention_impl.1} parent=71 // pred_check
          %p635 = pneg %p245
        $region82: #{_multimodal_attention_impl.1} parent=71 // pred_check_branch
          %637 = sbr.rel (%p635) target = $region84
        $region83: #{_multimodal_attention_impl.1} parent=71 // pred_region
          %s638 = smul.u32 2, %s34
          %p639 = scmp.lt.s32.totalorder %s638, 3
          %s640 = scalar_select %p639, %s638, 3
          %s641 = smul.addr %s640, 8
          %s642 = scalar_lea.vmem %s8, %s641
        $region84: #{_multimodal_attention_impl.1} parent=71 // pred_fallthru
          _
      $region72: #{_multimodal_attention_impl.1} parent=5 // pred_fallthru
        _
    $region6: #{_multimodal_attention_impl.1} parent=1 // loop_footer
      %s32 = sadd.s32 1, %s28
    $region7: #{_multimodal_attention_impl.1} parent=1 // loop_footer_branch
      %27 = sbr.rel target = $region3
    $region8: #{_multimodal_attention_impl.1} parent=1 // loop_exit
      _
    %643 = vsyncpa [#allocation4], 1
    %s644 = scalar_lea.sflag [#allocation4], 1
    %645 = vsyncpa %s644, 1
    %646 = vsyncpa [#allocation7], 1
    %s647 = scalar_lea.sflag [#allocation7], 1
    %648 = vsyncpa %s647, 1
    %649 = vsyncpa [#allocation5], 1
    %s650 = scalar_lea.sflag [#allocation5], 1
    %651 = vsyncpa %s650, 1
    %652 = vsyncpa [#allocation11], 1
    %s653 = scalar_lea.sflag [#allocation11], 1
    %654 = vsyncpa %s653, 1

</llo_original>
